<compile_context>
chip_gen: v7x
topology: tpu7x:2x2x1
jax: 0.10.0
libtpu: 0.0.40
codegen_flags: <defaults>
</compile_context>

<pallas_src>
import math
import functools

import jax
import jax.numpy as jnp
from jax.experimental import pallas as pl
from jax.experimental.pallas import tpu as pltpu


def _layer_norm(x, gamma, beta, eps=1e-5):
    # x: (S, D), gamma/beta: (1, D). Biased variance, matching torch.nn.LayerNorm.
    mu = jnp.mean(x, axis=-1, keepdims=True)
    xc = x - mu
    var = jnp.mean(xc * xc, axis=-1, keepdims=True)
    return xc * jax.lax.rsqrt(var + eps) * gamma + beta


def _encoder_layer_kernel(
    x_ref,
    wq_ref, bq_ref, wk_ref, bk_ref, wv_ref, bv_ref, wo_ref, bo_ref,
    g1_ref, be1_ref,
    w1_ref, b1_ref, w2_ref, b2_ref,
    g2_ref, be2_ref,
    o_ref,
    *, n_head, d_k,
):
    f32 = jnp.float32
    bf16 = jnp.bfloat16

    x = x_ref[...].astype(f32)                                   # (S, D)
    S, D = x.shape
    xb = jnp.broadcast_to(x.astype(bf16)[None], (n_head, S, D))  # (H, S, D), hoisted once

    scale = 1.0 / math.sqrt(d_k)

    # ---- Multi-head self-attention (all heads in one batched contraction) ----
    # Weights are pre-split per head: wq/wk/wv (H, D, dk), biases (H, 1, dk).
    q = jnp.einsum("hsd,hdk->hsk", xb, wq_ref[...], preferred_element_type=f32)
    q = (q + bq_ref[...]) * scale                                # fold 1/sqrt(dk) into q
    k = jnp.einsum("hsd,hdk->hsk", xb, wk_ref[...], preferred_element_type=f32) + bk_ref[...]
    v = jnp.einsum("hsd,hdk->hsk", xb, wv_ref[...], preferred_element_type=f32) + bv_ref[...]

    # Scores + softmax: bf16 MXU inputs, f32 accumulation and statistics.
    s = jnp.einsum("hqd,hkd->hqk", q.astype(bf16), k.astype(bf16),
                   preferred_element_type=f32)                   # (H, S, S)
    s = s - jnp.max(s, axis=-1, keepdims=True)
    p = jnp.exp(s)
    p = p * pl.reciprocal(jnp.sum(p, axis=-1, keepdims=True), approx=True)

    ctx = jnp.einsum("hqk,hkd->hqd", p.astype(bf16), v.astype(bf16),
                     preferred_element_type=f32)                 # (H, S, dk)

    # Output projection: per-head (dk x D) slabs summed over heads == concat(heads) @ Wo.
    attn = jnp.einsum("hsd,hdm->hsm", ctx.astype(bf16), wo_ref[...],
                      preferred_element_type=f32)                # (H, S, D)
    attn = jnp.sum(attn, axis=0) + bo_ref[...]                   # (S, D)

    # Residual + LayerNorm (attention_dropout is identity in eval mode).
    y = _layer_norm(x + attn, g1_ref[...], be1_ref[...])

    # ---- Feed-forward: Linear -> ReLU -> Linear (inner Dropout is identity) ----
    h1 = jnp.dot(y.astype(bf16), w1_ref[...], preferred_element_type=f32) + b1_ref[...]
    h1 = jnp.maximum(h1, 0.0)
    ff = jnp.dot(h1.astype(bf16), w2_ref[...], preferred_element_type=f32) + b2_ref[...]

    # Residual + LayerNorm (ff_dropout is identity in eval mode).
    z = _layer_norm(y + ff, g2_ref[...], be2_ref[...])

    o_ref[...] = z.astype(o_ref.dtype)


def transformer_encoder_layer(x, params, *, n_head):
    """x: (B, S, D) float32.  params: dict of f32 weights (see init_params)."""
    B, S, D = x.shape
    F = params["w1"].shape[1]
    d_k = D // n_head
    bf16 = jnp.bfloat16
    f32 = jnp.float32

    # Pre-split the projection weights per head in plain JAX (outside the kernel) so the
    # kernel only runs leading-batch-dim batched matmuls with no reshape/transpose.
    def split_in(w):        # (D, D) -> (H, D, d_k)
        return jnp.transpose(w.reshape(D, n_head, d_k), (1, 0, 2)).astype(bf16)

    def split_in_bias(b):   # (1, D) -> (H, 1, d_k)
        return jnp.transpose(b.reshape(1, n_head, d_k), (1, 0, 2)).astype(f32)

    def split_out(w):       # (D, D) == (H*d_k, D) -> (H, d_k, D)
        return w.reshape(n_head, d_k, D).astype(bf16)

    wq = split_in(params["wq"])
    wk = split_in(params["wk"])
    wv = split_in(params["wv"])
    bq = split_in_bias(params["bq"])
    bk = split_in_bias(params["bk"])
    bv = split_in_bias(params["bv"])
    wo = split_out(params["wo"])
    bo = params["bo"].astype(f32)
    w1 = params["w1"].astype(bf16)
    b1 = params["b1"].astype(f32)
    w2 = params["w2"].astype(bf16)
    b2 = params["b2"].astype(f32)

    kernel = functools.partial(_encoder_layer_kernel, n_head=n_head, d_k=d_k)

    def rep2(shape):
        return pl.BlockSpec(shape, lambda b: (0, 0))

    def rep3(shape):
        return pl.BlockSpec(shape, lambda b: (0, 0, 0))

    in_specs = [
        pl.BlockSpec((None, S, D), lambda b: (b, 0, 0)),    # x (batch dim squeezed)
        rep3((n_head, D, d_k)), rep3((n_head, 1, d_k)),     # wq, bq
        rep3((n_head, D, d_k)), rep3((n_head, 1, d_k)),     # wk, bk
        rep3((n_head, D, d_k)), rep3((n_head, 1, d_k)),     # wv, bv
        rep3((n_head, d_k, D)), rep2((1, D)),               # wo, bo
        rep2((1, D)), rep2((1, D)),                         # ln1 gamma, beta
        rep2((D, F)), rep2((1, F)),                         # w1, b1
        rep2((F, D)), rep2((1, D)),                         # w2, b2
        rep2((1, D)), rep2((1, D)),                         # ln2 gamma, beta
    ]

    flops = B * (8 * S * D * D + 4 * S * S * D + 4 * S * D * F)
    transcendentals = B * (n_head * S * S + 2 * S)
    bytes_accessed = (2 * B * S * D * 4                    # x in + out (f32)
                      + (4 * D * D + 2 * D * F) * 2        # matmul weights (bf16)
                      + (6 * D + F) * 4)                   # biases + LN params (f32)

    return pl.pallas_call(
        kernel,
        out_shape=jax.ShapeDtypeStruct((B, S, D), x.dtype),
        grid_spec=pltpu.PrefetchScalarGridSpec(
            num_scalar_prefetch=0,
            grid=(B,),
            in_specs=in_specs,
            out_specs=pl.BlockSpec((None, S, D), lambda b: (b, 0, 0)),
        ),
        compiler_params=pltpu.CompilerParams(
            dimension_semantics=("parallel",),
        ),
        cost_estimate=pl.CostEstimate(
            flops=int(flops),
            transcendentals=int(transcendentals),
            bytes_accessed=int(bytes_accessed),
        ),
    )(
        x,
        wq, bq, wk, bk, wv, bv, wo, bo,
        params["ln1_g"].astype(f32), params["ln1_b"].astype(f32),
        w1, b1, w2, b2,
        params["ln2_g"].astype(f32), params["ln2_b"].astype(f32),
    )


def init_params(key, d_model, n_head, dim_feedforward):
    """Deterministic synthetic weights. Linear weights stored as (in, out): y = x @ W + b."""
    D, F = d_model, dim_feedforward
    keys = jax.random.split(key, 12)
    s = 0.05

    def w(k, shape):
        return jax.random.normal(k, shape, jnp.float32) * s

    return {
        "wq": w(keys[0], (D, D)), "bq": w(keys[1], (1, D)),
        "wk": w(keys[2], (D, D)), "bk": w(keys[3], (1, D)),
        "wv": w(keys[4], (D, D)), "bv": w(keys[5], (1, D)),
        "wo": w(keys[6], (D, D)), "bo": w(keys[7], (1, D)),
        "ln1_g": jnp.ones((1, D), jnp.float32), "ln1_b": jnp.zeros((1, D), jnp.float32),
        "w1": w(keys[8], (D, F)), "b1": w(keys[9], (1, F)),
        "w2": w(keys[10], (F, D)), "b2": w(keys[11], (1, D)),
        "ln2_g": jnp.ones((1, D), jnp.float32), "ln2_b": jnp.zeros((1, D), jnp.float32),
    }


def reference_forward(x, params, n_head):
    """Pure-JAX f32 reference of the same eval-mode encoder layer."""
    B, S, D = x.shape
    d_k = D // n_head

    def ln(v, g, b, eps=1e-5):
        mu = jnp.mean(v, -1, keepdims=True)
        var = jnp.mean((v - mu) ** 2, -1, keepdims=True)
        return (v - mu) / jnp.sqrt(var + eps) * g + b

    q = x @ params["wq"] + params["bq"]
    k = x @ params["wk"] + params["bk"]
    v = x @ params["wv"] + params["bv"]

    def split(t):
        return t.reshape(B, S, n_head, d_k).transpose(0, 2, 1, 3)

    qh, kh, vh = split(q), split(k), split(v)
    s = jnp.einsum("bhqd,bhkd->bhqk", qh, kh) / math.sqrt(d_k)
    p = jax.nn.softmax(s, axis=-1)
    ctx = jnp.einsum("bhqk,bhkd->bhqd", p, vh).transpose(0, 2, 1, 3).reshape(B, S, D)
    attn = ctx @ params["wo"] + params["bo"]
    y = ln(x + attn, params["ln1_g"], params["ln1_b"])
    h1 = jnp.maximum(y @ params["w1"] + params["b1"], 0.0)
    ff = h1 @ params["w2"] + params["b2"]
    return ln(y + ff, params["ln2_g"], params["ln2_b"])


if __name__ == "__main__":
    # Small shapes consistent with the module: batch=2, seq=8, d_model=32, n_head=4, ff=64.
    B, S, D, H, F = 2, 8, 32, 4, 64
    key = jax.random.PRNGKey(0)
    k_x, k_p = jax.random.split(key)

    x = jax.random.normal(k_x, (B, S, D), jnp.float32)
    params = init_params(k_p, d_model=D, n_head=H, dim_feedforward=F)

    # TODO(synk): Dropout layers are modeled as identity (eval-mode semantics); no stochastic
    # dropout inside the kernel.
    out = transformer_encoder_layer(x, params, n_head=H)
    out = jax.block_until_ready(out)

    assert out.shape == (B, S, D) and out.dtype == jnp.float32
    assert bool(jnp.all(jnp.isfinite(out)))

    # Loose tolerance: kernel uses bf16 MXU inputs with f32 accumulation.
    ref = reference_forward(x, params, H)
    max_err = float(jnp.max(jnp.abs(out - ref)))
    assert max_err < 5e-2, f"max abs error {max_err}"

    print("KERNEL_OK")
</pallas_src>

<mosaic_0001>
module attributes {stable_mosaic.version = 11 : i64} {
  func.func @_encoder_layer_kernel(%arg0: i32, %arg1: memref<1x8x32xf32, #tpu.memory_space<vmem>>, %arg2: memref<4x32x8xbf16, #tpu.memory_space<vmem>>, %arg3: memref<4x1x8xf32, #tpu.memory_space<vmem>>, %arg4: memref<4x32x8xbf16, #tpu.memory_space<vmem>>, %arg5: memref<4x1x8xf32, #tpu.memory_space<vmem>>, %arg6: memref<4x32x8xbf16, #tpu.memory_space<vmem>>, %arg7: memref<4x1x8xf32, #tpu.memory_space<vmem>>, %arg8: memref<4x8x32xbf16, #tpu.memory_space<vmem>>, %arg9: memref<1x32xf32, #tpu.memory_space<vmem>>, %arg10: memref<1x32xf32, #tpu.memory_space<vmem>>, %arg11: memref<1x32xf32, #tpu.memory_space<vmem>>, %arg12: memref<32x64xbf16, #tpu.memory_space<vmem>>, %arg13: memref<1x64xf32, #tpu.memory_space<vmem>>, %arg14: memref<64x32xbf16, #tpu.memory_space<vmem>>, %arg15: memref<1x32xf32, #tpu.memory_space<vmem>>, %arg16: memref<1x32xf32, #tpu.memory_space<vmem>>, %arg17: memref<1x32xf32, #tpu.memory_space<vmem>>, %arg18: memref<1x8x32xf32, #tpu.memory_space<vmem>>) attributes {dimension_semantics = [#tpu.dimension_semantics<parallel>], iteration_bounds = array<i64: 2>, scalar_prefetch = 0 : i64, scratch_operands = 0 : i64, tpu.core_type = #tpu.core_type<tc>, window_params = [{transform_indices = @transform_0, window_bounds = array<i64: 1, 8, 32>}, {pipeline_mode = #tpu.pipeline_mode<synchronous>, transform_indices = @transform_1, window_bounds = array<i64: 4, 32, 8>}, {pipeline_mode = #tpu.pipeline_mode<synchronous>, transform_indices = @transform_2, window_bounds = array<i64: 4, 1, 8>}, {pipeline_mode = #tpu.pipeline_mode<synchronous>, transform_indices = @transform_3, window_bounds = array<i64: 4, 32, 8>}, {pipeline_mode = #tpu.pipeline_mode<synchronous>, transform_indices = @transform_4, window_bounds = array<i64: 4, 1, 8>}, {pipeline_mode = #tpu.pipeline_mode<synchronous>, transform_indices = @transform_5, window_bounds = array<i64: 4, 32, 8>}, {pipeline_mode = #tpu.pipeline_mode<synchronous>, transform_indices = @transform_6, window_bounds = array<i64: 4, 1, 8>}, {pipeline_mode = #tpu.pipeline_mode<synchronous>, transform_indices = @transform_7, window_bounds = array<i64: 4, 8, 32>}, {pipeline_mode = #tpu.pipeline_mode<synchronous>, transform_indices = @transform_8, window_bounds = array<i64: 1, 32>}, {pipeline_mode = #tpu.pipeline_mode<synchronous>, transform_indices = @transform_9, window_bounds = array<i64: 1, 32>}, {pipeline_mode = #tpu.pipeline_mode<synchronous>, transform_indices = @transform_10, window_bounds = array<i64: 1, 32>}, {pipeline_mode = #tpu.pipeline_mode<synchronous>, transform_indices = @transform_11, window_bounds = array<i64: 32, 64>}, {pipeline_mode = #tpu.pipeline_mode<synchronous>, transform_indices = @transform_12, window_bounds = array<i64: 1, 64>}, {pipeline_mode = #tpu.pipeline_mode<synchronous>, transform_indices = @transform_13, window_bounds = array<i64: 64, 32>}, {pipeline_mode = #tpu.pipeline_mode<synchronous>, transform_indices = @transform_14, window_bounds = array<i64: 1, 32>}, {pipeline_mode = #tpu.pipeline_mode<synchronous>, transform_indices = @transform_15, window_bounds = array<i64: 1, 32>}, {pipeline_mode = #tpu.pipeline_mode<synchronous>, transform_indices = @transform_16, window_bounds = array<i64: 1, 32>}, {transform_indices = @transform_17, window_bounds = array<i64: 1, 8, 32>}]} {
    %c0 = arith.constant 0 : index
    %c0_0 = arith.constant 0 : index
    %c0_1 = arith.constant 0 : index
    %0 = vector.load %arg1[%c0, %c0_0, %c0_1] : memref<1x8x32xf32, #tpu.memory_space<vmem>>, vector<1x8x32xf32>
    %1 = vector.shape_cast %0 : vector<1x8x32xf32> to vector<8x32xf32>
    %2 = arith.truncf %1 : vector<8x32xf32> to vector<8x32xbf16>
    %3 = vector.shape_cast %2 : vector<8x32xbf16> to vector<1x8x32xbf16>
    %4 = vector.shape_cast %3 : vector<1x8x32xbf16> to vector<1x8x32xbf16>
    %5 = vector.broadcast %4 : vector<1x8x32xbf16> to vector<4x8x32xbf16>
    %c0_2 = arith.constant 0 : index
    %c0_3 = arith.constant 0 : index
    %c0_4 = arith.constant 0 : index
    %6 = vector.load %arg2[%c0_2, %c0_3, %c0_4] : memref<4x32x8xbf16, #tpu.memory_space<vmem>>, vector<4x32x8xbf16>
    "tpu.trace_start"() <{level = 10 : i32, message = "hsd,hdk->hsk"}> : () -> ()
    %cst = arith.constant dense<0.000000e+00> : vector<4x8x8xf32>
    %7 = tpu.matmul %5, %6, %cst {dimension_numbers = #tpu.dot_dimension_numbers<[2], [1], [1], [2], [0, 0, 0, 1, 1, 2], [0], [0]>} : vector<4x8x32xbf16>, vector<4x32x8xbf16>, vector<4x8x8xf32> -> vector<4x8x8xf32>
    "tpu.trace_stop"() : () -> ()
    %c0_5 = arith.constant 0 : index
    %c0_6 = arith.constant 0 : index
    %c0_7 = arith.constant 0 : index
    %8 = vector.load %arg3[%c0_5, %c0_6, %c0_7] : memref<4x1x8xf32, #tpu.memory_space<vmem>>, vector<4x1x8xf32>
    %9 = vector.broadcast %8 : vector<4x1x8xf32> to vector<4x8x8xf32>
    %10 = arith.addf %7, %9 : vector<4x8x8xf32>
    %cst_8 = arith.constant 0.353553385 : f32
    %11 = vector.broadcast %cst_8 : f32 to vector<4x8x8xf32>
    %12 = arith.mulf %10, %11 : vector<4x8x8xf32>
    %c0_9 = arith.constant 0 : index
    %c0_10 = arith.constant 0 : index
    %c0_11 = arith.constant 0 : index
    %13 = vector.load %arg4[%c0_9, %c0_10, %c0_11] : memref<4x32x8xbf16, #tpu.memory_space<vmem>>, vector<4x32x8xbf16>
    "tpu.trace_start"() <{level = 10 : i32, message = "hsd,hdk->hsk"}> : () -> ()
    %cst_12 = arith.constant dense<0.000000e+00> : vector<4x8x8xf32>
    %14 = tpu.matmul %5, %13, %cst_12 {dimension_numbers = #tpu.dot_dimension_numbers<[2], [1], [1], [2], [0, 0, 0, 1, 1, 2], [0], [0]>} : vector<4x8x32xbf16>, vector<4x32x8xbf16>, vector<4x8x8xf32> -> vector<4x8x8xf32>
    "tpu.trace_stop"() : () -> ()
    %c0_13 = arith.constant 0 : index
    %c0_14 = arith.constant 0 : index
    %c0_15 = arith.constant 0 : index
    %15 = vector.load %arg5[%c0_13, %c0_14, %c0_15] : memref<4x1x8xf32, #tpu.memory_space<vmem>>, vector<4x1x8xf32>
    %16 = vector.broadcast %15 : vector<4x1x8xf32> to vector<4x8x8xf32>
    %17 = arith.addf %14, %16 : vector<4x8x8xf32>
    %c0_16 = arith.constant 0 : index
    %c0_17 = arith.constant 0 : index
    %c0_18 = arith.constant 0 : index
    %18 = vector.load %arg6[%c0_16, %c0_17, %c0_18] : memref<4x32x8xbf16, #tpu.memory_space<vmem>>, vector<4x32x8xbf16>
    "tpu.trace_start"() <{level = 10 : i32, message = "hsd,hdk->hsk"}> : () -> ()
    %cst_19 = arith.constant dense<0.000000e+00> : vector<4x8x8xf32>
    %19 = tpu.matmul %5, %18, %cst_19 {dimension_numbers = #tpu.dot_dimension_numbers<[2], [1], [1], [2], [0, 0, 0, 1, 1, 2], [0], [0]>} : vector<4x8x32xbf16>, vector<4x32x8xbf16>, vector<4x8x8xf32> -> vector<4x8x8xf32>
    "tpu.trace_stop"() : () -> ()
    %c0_20 = arith.constant 0 : index
    %c0_21 = arith.constant 0 : index
    %c0_22 = arith.constant 0 : index
    %20 = vector.load %arg7[%c0_20, %c0_21, %c0_22] : memref<4x1x8xf32, #tpu.memory_space<vmem>>, vector<4x1x8xf32>
    %21 = vector.broadcast %20 : vector<4x1x8xf32> to vector<4x8x8xf32>
    %22 = arith.addf %19, %21 : vector<4x8x8xf32>
    %23 = arith.truncf %12 : vector<4x8x8xf32> to vector<4x8x8xbf16>
    %24 = arith.truncf %17 : vector<4x8x8xf32> to vector<4x8x8xbf16>
    "tpu.trace_start"() <{level = 10 : i32, message = "hqd,hkd->hqk"}> : () -> ()
    %cst_23 = arith.constant dense<0.000000e+00> : vector<4x8x8xf32>
    %25 = tpu.matmul %23, %24, %cst_23 {dimension_numbers = #tpu.dot_dimension_numbers<[2], [2], [1], [1], [0, 0, 0, 1, 1, 1], [0], [0]>} : vector<4x8x8xbf16>, vector<4x8x8xbf16>, vector<4x8x8xf32> -> vector<4x8x8xf32>
    "tpu.trace_stop"() : () -> ()
    %cst_24 = arith.constant dense<0xFF800000> : vector<4x8xf32>
    %26 = vector.multi_reduction <maximumf>, %25, %cst_24 [2] : vector<4x8x8xf32> to vector<4x8xf32>
    %27 = vector.shape_cast %26 : vector<4x8xf32> to vector<4x8x1xf32>
    %28 = vector.broadcast %27 : vector<4x8x1xf32> to vector<4x8x8xf32>
    %29 = arith.subf %25, %28 : vector<4x8x8xf32>
    %30 = math.exp %29 : vector<4x8x8xf32>
    %cst_25 = arith.constant dense<0.000000e+00> : vector<4x8xf32>
    %31 = vector.multi_reduction <add>, %30, %cst_25 [2] : vector<4x8x8xf32> to vector<4x8xf32>
    %32 = vector.shape_cast %31 : vector<4x8xf32> to vector<4x8x1xf32>
    %33 = tpu.reciprocal %32 {approx = true} : vector<4x8x1xf32> -> vector<4x8x1xf32>
    %34 = vector.broadcast %33 : vector<4x8x1xf32> to vector<4x8x8xf32>
    %35 = arith.mulf %30, %34 : vector<4x8x8xf32>
    %36 = arith.truncf %35 : vector<4x8x8xf32> to vector<4x8x8xbf16>
    %37 = arith.truncf %22 : vector<4x8x8xf32> to vector<4x8x8xbf16>
    "tpu.trace_start"() <{level = 10 : i32, message = "hqk,hkd->hqd"}> : () -> ()
    %cst_26 = arith.constant dense<0.000000e+00> : vector<4x8x8xf32>
    %38 = tpu.matmul %36, %37, %cst_26 {dimension_numbers = #tpu.dot_dimension_numbers<[2], [1], [1], [2], [0, 0, 0, 1, 1, 2], [0], [0]>} : vector<4x8x8xbf16>, vector<4x8x8xbf16>, vector<4x8x8xf32> -> vector<4x8x8xf32>
    "tpu.trace_stop"() : () -> ()
    %39 = arith.truncf %38 : vector<4x8x8xf32> to vector<4x8x8xbf16>
    %c0_27 = arith.constant 0 : index
    %c0_28 = arith.constant 0 : index
    %c0_29 = arith.constant 0 : index
    %40 = vector.load %arg8[%c0_27, %c0_28, %c0_29] : memref<4x8x32xbf16, #tpu.memory_space<vmem>>, vector<4x8x32xbf16>
    "tpu.trace_start"() <{level = 10 : i32, message = "hsd,hdm->hsm"}> : () -> ()
    %cst_30 = arith.constant dense<0.000000e+00> : vector<4x8x32xf32>
    %41 = tpu.matmul %39, %40, %cst_30 {dimension_numbers = #tpu.dot_dimension_numbers<[2], [1], [1], [2], [0, 0, 0, 1, 1, 2], [0], [0]>} : vector<4x8x8xbf16>, vector<4x8x32xbf16>, vector<4x8x32xf32> -> vector<4x8x32xf32>
    "tpu.trace_stop"() : () -> ()
    %cst_31 = arith.constant dense<0.000000e+00> : vector<8x32xf32>
    %42 = vector.multi_reduction <add>, %41, %cst_31 [0] : vector<4x8x32xf32> to vector<8x32xf32>
    %c0_32 = arith.constant 0 : index
    %c0_33 = arith.constant 0 : index
    %43 = vector.load %arg9[%c0_32, %c0_33] : memref<1x32xf32, #tpu.memory_space<vmem>>, vector<1x32xf32>
    %44 = vector.broadcast %43 : vector<1x32xf32> to vector<8x32xf32>
    %45 = arith.addf %42, %44 : vector<8x32xf32>
    %46 = arith.addf %1, %45 : vector<8x32xf32>
    %c0_34 = arith.constant 0 : index
    %c0_35 = arith.constant 0 : index
    %47 = vector.load %arg10[%c0_34, %c0_35] : memref<1x32xf32, #tpu.memory_space<vmem>>, vector<1x32xf32>
    %c0_36 = arith.constant 0 : index
    %c0_37 = arith.constant 0 : index
    %48 = vector.load %arg11[%c0_36, %c0_37] : memref<1x32xf32, #tpu.memory_space<vmem>>, vector<1x32xf32>
    %cst_38 = arith.constant dense<0.000000e+00> : vector<8xf32>
    %49 = vector.multi_reduction <add>, %46, %cst_38 [1] : vector<8x32xf32> to vector<8xf32>
    %50 = vector.shape_cast %49 : vector<8xf32> to vector<8x1xf32>
    %cst_39 = arith.constant 3.200000e+01 : f32
    %51 = vector.broadcast %cst_39 : f32 to vector<8x1xf32>
    %52 = arith.divf %50, %51 : vector<8x1xf32>
    %53 = vector.broadcast %52 : vector<8x1xf32> to vector<8x32xf32>
    %54 = arith.subf %46, %53 : vector<8x32xf32>
    %55 = arith.mulf %54, %54 : vector<8x32xf32>
    %cst_40 = arith.constant dense<0.000000e+00> : vector<8xf32>
    %56 = vector.multi_reduction <add>, %55, %cst_40 [1] : vector<8x32xf32> to vector<8xf32>
    %57 = vector.shape_cast %56 : vector<8xf32> to vector<8x1xf32>
    %cst_41 = arith.constant 3.200000e+01 : f32
    %58 = vector.broadcast %cst_41 : f32 to vector<8x1xf32>
    %59 = arith.divf %57, %58 : vector<8x1xf32>
    %cst_42 = arith.constant 9.99999974E-6 : f32
    %60 = vector.broadcast %cst_42 : f32 to vector<8x1xf32>
    %61 = arith.addf %59, %60 : vector<8x1xf32>
    %62 = math.rsqrt %61 : vector<8x1xf32>
    %63 = vector.broadcast %62 : vector<8x1xf32> to vector<8x32xf32>
    %64 = arith.mulf %54, %63 : vector<8x32xf32>
    %65 = vector.broadcast %47 : vector<1x32xf32> to vector<8x32xf32>
    %66 = arith.mulf %64, %65 : vector<8x32xf32>
    %67 = vector.broadcast %48 : vector<1x32xf32> to vector<8x32xf32>
    %68 = arith.addf %66, %67 : vector<8x32xf32>
    %69 = arith.truncf %68 : vector<8x32xf32> to vector<8x32xbf16>
    %c0_43 = arith.constant 0 : index
    %c0_44 = arith.constant 0 : index
    %70 = vector.load %arg12[%c0_43, %c0_44] : memref<32x64xbf16, #tpu.memory_space<vmem>>, vector<32x64xbf16>
    %cst_45 = arith.constant dense<0.000000e+00> : vector<8x64xf32>
    %71 = tpu.matmul %69, %70, %cst_45 {dimension_numbers = #tpu.dot_dimension_numbers<[1], [0], [0], [1], [0, 0, 1, 1], [], []>} : vector<8x32xbf16>, vector<32x64xbf16>, vector<8x64xf32> -> vector<8x64xf32>
    %c0_46 = arith.constant 0 : index
    %c0_47 = arith.constant 0 : index
    %72 = vector.load %arg13[%c0_46, %c0_47] : memref<1x64xf32, #tpu.memory_space<vmem>>, vector<1x64xf32>
    %73 = vector.broadcast %72 : vector<1x64xf32> to vector<8x64xf32>
    %74 = arith.addf %71, %73 : vector<8x64xf32>
    %cst_48 = arith.constant 0.000000e+00 : f32
    %75 = vector.broadcast %cst_48 : f32 to vector<8x64xf32>
    %76 = arith.maximumf %74, %75 : vector<8x64xf32>
    %77 = arith.truncf %76 : vector<8x64xf32> to vector<8x64xbf16>
    %c0_49 = arith.constant 0 : index
    %c0_50 = arith.constant 0 : index
    %78 = vector.load %arg14[%c0_49, %c0_50] : memref<64x32xbf16, #tpu.memory_space<vmem>>, vector<64x32xbf16>
    %cst_51 = arith.constant dense<0.000000e+00> : vector<8x32xf32>
    %79 = tpu.matmul %77, %78, %cst_51 {dimension_numbers = #tpu.dot_dimension_numbers<[1], [0], [0], [1], [0, 0, 1, 1], [], []>} : vector<8x64xbf16>, vector<64x32xbf16>, vector<8x32xf32> -> vector<8x32xf32>
    %c0_52 = arith.constant 0 : index
    %c0_53 = arith.constant 0 : index
    %80 = vector.load %arg15[%c0_52, %c0_53] : memref<1x32xf32, #tpu.memory_space<vmem>>, vector<1x32xf32>
    %81 = vector.broadcast %80 : vector<1x32xf32> to vector<8x32xf32>
    %82 = arith.addf %79, %81 : vector<8x32xf32>
    %83 = arith.addf %68, %82 : vector<8x32xf32>
    %c0_54 = arith.constant 0 : index
    %c0_55 = arith.constant 0 : index
    %84 = vector.load %arg16[%c0_54, %c0_55] : memref<1x32xf32, #tpu.memory_space<vmem>>, vector<1x32xf32>
    %c0_56 = arith.constant 0 : index
    %c0_57 = arith.constant 0 : index
    %85 = vector.load %arg17[%c0_56, %c0_57] : memref<1x32xf32, #tpu.memory_space<vmem>>, vector<1x32xf32>
    %cst_58 = arith.constant dense<0.000000e+00> : vector<8xf32>
    %86 = vector.multi_reduction <add>, %83, %cst_58 [1] : vector<8x32xf32> to vector<8xf32>
    %87 = vector.shape_cast %86 : vector<8xf32> to vector<8x1xf32>
    %cst_59 = arith.constant 3.200000e+01 : f32
    %88 = vector.broadcast %cst_59 : f32 to vector<8x1xf32>
    %89 = arith.divf %87, %88 : vector<8x1xf32>
    %90 = vector.broadcast %89 : vector<8x1xf32> to vector<8x32xf32>
    %91 = arith.subf %83, %90 : vector<8x32xf32>
    %92 = arith.mulf %91, %91 : vector<8x32xf32>
    %cst_60 = arith.constant dense<0.000000e+00> : vector<8xf32>
    %93 = vector.multi_reduction <add>, %92, %cst_60 [1] : vector<8x32xf32> to vector<8xf32>
    %94 = vector.shape_cast %93 : vector<8xf32> to vector<8x1xf32>
    %cst_61 = arith.constant 3.200000e+01 : f32
    %95 = vector.broadcast %cst_61 : f32 to vector<8x1xf32>
    %96 = arith.divf %94, %95 : vector<8x1xf32>
    %cst_62 = arith.constant 9.99999974E-6 : f32
    %97 = vector.broadcast %cst_62 : f32 to vector<8x1xf32>
    %98 = arith.addf %96, %97 : vector<8x1xf32>
    %99 = math.rsqrt %98 : vector<8x1xf32>
    %100 = vector.broadcast %99 : vector<8x1xf32> to vector<8x32xf32>
    %101 = arith.mulf %91, %100 : vector<8x32xf32>
    %102 = vector.broadcast %84 : vector<1x32xf32> to vector<8x32xf32>
    %103 = arith.mulf %101, %102 : vector<8x32xf32>
    %104 = vector.broadcast %85 : vector<1x32xf32> to vector<8x32xf32>
    %105 = arith.addf %103, %104 : vector<8x32xf32>
    %c0_63 = arith.constant 0 : index
    %c0_64 = arith.constant 0 : index
    %c0_65 = arith.constant 0 : index
    %106 = vector.load %arg18[%c0_63, %c0_64, %c0_65] : memref<1x8x32xf32, #tpu.memory_space<vmem>>, vector<1x8x32xf32>
    %107 = vector.shape_cast %106 : vector<1x8x32xf32> to vector<8x32xf32>
    %108 = vector.shape_cast %105 : vector<8x32xf32> to vector<1x8x32xf32>
    tpu.vector_store %arg18[%c0_63, %c0_64, %c0_65], %108 {strides = array<i32>} : memref<1x8x32xf32, #tpu.memory_space<vmem>>, vector<1x8x32xf32>,
    return
  }
  func.func @transform_0(%arg0: i32) -> (i32, i32, i32) {
    %c0_i32 = arith.constant 0 : i32
    %c0_i32_0 = arith.constant 0 : i32
    %c0_i32_1 = arith.constant 0 : i32
    return %arg0, %c0_i32, %c0_i32_0 : i32, i32, i32
  }
  func.func @transform_1(%arg0: i32) -> (i32, i32, i32) {
    %c0_i32 = arith.constant 0 : i32
    %c0_i32_0 = arith.constant 0 : i32
    %c0_i32_1 = arith.constant 0 : i32
    %c0_i32_2 = arith.constant 0 : i32
    return %c0_i32, %c0_i32_0, %c0_i32_1 : i32, i32, i32
  }
  func.func @transform_2(%arg0: i32) -> (i32, i32, i32) {
    %c0_i32 = arith.constant 0 : i32
    %c0_i32_0 = arith.constant 0 : i32
    %c0_i32_1 = arith.constant 0 : i32
    %c0_i32_2 = arith.constant 0 : i32
    return %c0_i32, %c0_i32_0, %c0_i32_1 : i32, i32, i32
  }
  func.func @transform_3(%arg0: i32) -> (i32, i32, i32) {
    %c0_i32 = arith.constant 0 : i32
    %c0_i32_0 = arith.constant 0 : i32
    %c0_i32_1 = arith.constant 0 : i32
    %c0_i32_2 = arith.constant 0 : i32
    return %c0_i32, %c0_i32_0, %c0_i32_1 : i32, i32, i32
  }
  func.func @transform_4(%arg0: i32) -> (i32, i32, i32) {
    %c0_i32 = arith.constant 0 : i32
    %c0_i32_0 = arith.constant 0 : i32
    %c0_i32_1 = arith.constant 0 : i32
    %c0_i32_2 = arith.constant 0 : i32
    return %c0_i32, %c0_i32_0, %c0_i32_1 : i32, i32, i32
  }
  func.func @transform_5(%arg0: i32) -> (i32, i32, i32) {
    %c0_i32 = arith.constant 0 : i32
    %c0_i32_0 = arith.constant 0 : i32
    %c0_i32_1 = arith.constant 0 : i32
    %c0_i32_2 = arith.constant 0 : i32
    return %c0_i32, %c0_i32_0, %c0_i32_1 : i32, i32, i32
  }
  func.func @transform_6(%arg0: i32) -> (i32, i32, i32) {
    %c0_i32 = arith.constant 0 : i32
    %c0_i32_0 = arith.constant 0 : i32
    %c0_i32_1 = arith.constant 0 : i32
    %c0_i32_2 = arith.constant 0 : i32
    return %c0_i32, %c0_i32_0, %c0_i32_1 : i32, i32, i32
  }
  func.func @transform_7(%arg0: i32) -> (i32, i32, i32) {
    %c0_i32 = arith.constant 0 : i32
    %c0_i32_0 = arith.constant 0 : i32
    %c0_i32_1 = arith.constant 0 : i32
    %c0_i32_2 = arith.constant 0 : i32
    return %c0_i32, %c0_i32_0, %c0_i32_1 : i32, i32, i32
  }
  func.func @transform_8(%arg0: i32) -> (i32, i32) {
    %c0_i32 = arith.constant 0 : i32
    %c0_i32_0 = arith.constant 0 : i32
    %c0_i32_1 = arith.constant 0 : i32
    return %c0_i32, %c0_i32_0 : i32, i32
  }
  func.func @transform_9(%arg0: i32) -> (i32, i32) {
    %c0_i32 = arith.constant 0 : i32
    %c0_i32_0 = arith.constant 0 : i32
    %c0_i32_1 = arith.constant 0 : i32
    return %c0_i32, %c0_i32_0 : i32, i32
  }
  func.func @transform_10(%arg0: i32) -> (i32, i32) {
    %c0_i32 = arith.constant 0 : i32
    %c0_i32_0 = arith.constant 0 : i32
    %c0_i32_1 = arith.constant 0 : i32
    return %c0_i32, %c0_i32_0 : i32, i32
  }
  func.func @transform_11(%arg0: i32) -> (i32, i32) {
    %c0_i32 = arith.constant 0 : i32
    %c0_i32_0 = arith.constant 0 : i32
    %c0_i32_1 = arith.constant 0 : i32
    return %c0_i32, %c0_i32_0 : i32, i32
  }
  func.func @transform_12(%arg0: i32) -> (i32, i32) {
    %c0_i32 = arith.constant 0 : i32
    %c0_i32_0 = arith.constant 0 : i32
    %c0_i32_1 = arith.constant 0 : i32
    return %c0_i32, %c0_i32_0 : i32, i32
  }
  func.func @transform_13(%arg0: i32) -> (i32, i32) {
    %c0_i32 = arith.constant 0 : i32
    %c0_i32_0 = arith.constant 0 : i32
    %c0_i32_1 = arith.constant 0 : i32
    return %c0_i32, %c0_i32_0 : i32, i32
  }
  func.func @transform_14(%arg0: i32) -> (i32, i32) {
    %c0_i32 = arith.constant 0 : i32
    %c0_i32_0 = arith.constant 0 : i32
    %c0_i32_1 = arith.constant 0 : i32
    return %c0_i32, %c0_i32_0 : i32, i32
  }
  func.func @transform_15(%arg0: i32) -> (i32, i32) {
    %c0_i32 = arith.constant 0 : i32
    %c0_i32_0 = arith.constant 0 : i32
    %c0_i32_1 = arith.constant 0 : i32
    return %c0_i32, %c0_i32_0 : i32, i32
  }
  func.func @transform_16(%arg0: i32) -> (i32, i32) {
    %c0_i32 = arith.constant 0 : i32
    %c0_i32_0 = arith.constant 0 : i32
    %c0_i32_1 = arith.constant 0 : i32
    return %c0_i32, %c0_i32_0 : i32, i32
  }
  func.func @transform_17(%arg0: i32) -> (i32, i32, i32) {
    %c0_i32 = arith.constant 0 : i32
    %c0_i32_0 = arith.constant 0 : i32
    %c0_i32_1 = arith.constant 0 : i32
    return %arg0, %c0_i32, %c0_i32_0 : i32, i32, i32
  }
}

</mosaic_0001>

<llo_original>
// kernel: tpu_custom_call.1
$region0: #{tpu_custom_call.1}
  #allocation0 [shape = 'u32[]', space=smem, size = 0x4, offset = 0x4, fixed_abs, tag = 'smem constant byte address 0x4 - core index']
  #allocation1 [shape = 'u32[144,128]{1,0:T(1,128)}', space=vmem, size = 0x12000, scoped, tag = 'internal scratch']
  %s0 = inlined_call_operand.vmem [shape: f32[2,8,32], index: 0, kind: input, shape index: {}]
  %s1 = inlined_call_operand.vmem [shape: bf16[4,32,8], index: 1, kind: input, shape index: {}]
  %s2 = inlined_call_operand.vmem [shape: f32[4,1,8], index: 2, kind: input, shape index: {}]
  %s3 = inlined_call_operand.vmem [shape: bf16[4,32,8], index: 3, kind: input, shape index: {}]
  %s4 = inlined_call_operand.vmem [shape: f32[4,1,8], index: 4, kind: input, shape index: {}]
  %s5 = inlined_call_operand.vmem [shape: bf16[4,32,8], index: 5, kind: input, shape index: {}]
  %s6 = inlined_call_operand.vmem [shape: f32[4,1,8], index: 6, kind: input, shape index: {}]
  %s7 = inlined_call_operand.vmem [shape: bf16[4,8,32], index: 7, kind: input, shape index: {}]
  %s8 = inlined_call_operand.vmem [shape: f32[1,32], index: 8, kind: input, shape index: {}]
  %s9 = inlined_call_operand.vmem [shape: f32[1,32], index: 9, kind: input, shape index: {}]
  %s10 = inlined_call_operand.vmem [shape: f32[1,32], index: 10, kind: input, shape index: {}]
  %s11 = inlined_call_operand.vmem [shape: bf16[32,64], index: 11, kind: input, shape index: {}]
  %s12 = inlined_call_operand.vmem [shape: f32[1,64], index: 12, kind: input, shape index: {}]
  %s13 = inlined_call_operand.vmem [shape: bf16[64,32], index: 13, kind: input, shape index: {}]
  %s14 = inlined_call_operand.vmem [shape: f32[1,32], index: 14, kind: input, shape index: {}]
  %s15 = inlined_call_operand.vmem [shape: f32[1,32], index: 15, kind: input, shape index: {}]
  %s16 = inlined_call_operand.vmem [shape: f32[1,32], index: 16, kind: input, shape index: {}]
  %s17 = inlined_call_operand.hbm [shape: f32[2,8,32], index: 17, kind: output, shape index: {}]
  %s18 = sld [smem:[#allocation0]]
  $region101: #{tpu_custom_call.1} parent=0
    _
  %s20 = ssub.s32 1, %s18
  %s21 = scalar_select 0, %s20, %s18
  $region1: #{tpu_custom_call.1} parent=0
    #allocation2 [shape = 'u8[8192]{0}', space=vmem, size = 0x2000, scoped, tag = 'output window, operand 0']
    #allocation3 [shape = 's32[2]{0}', space=sflag, size = 0x8, scoped, tag = 'scoped memory for tpu_custom_call.1']
    %22 = vsyncpa [#allocation3], 0
    %s23 = scalar_lea.sflag [#allocation3], 1
    %24 = vsyncpa %s23, 0
    loop: start=0, step=1, limit=4
    $region2: #{tpu_custom_call.1} parent=1 // loop_pre_header
      _
    $region3: #{tpu_custom_call.1} parent=1 // loop_header
      %s26 = sphi 0, %s30
      %p27 = scmp.ge.s32.totalorder %s26, 4
      %s36 = sphi 0, %s38
      %s39 = sphi 0, %s36
      %s40 = sphi 0, %s39
      %s56 = sphi 0, %s40
      %s60 = sphi 0, %s60
      %s62 = sphi 0, %s60
      %s63 = sphi 0, %s62
      %s77 = sphi 0, %s63
      %s81 = sphi 0, %s81
      %s83 = sphi 0, %s81
      %s84 = sphi 0, %s83
      %s98 = sphi 0, %s84
      %s102 = sphi 0, %s102
      %s104 = sphi 0, %s102
      %s105 = sphi 0, %s104
      %s119 = sphi 0, %s105
      %s123 = sphi 0, %s123
      %s125 = sphi 0, %s123
      %s126 = sphi 0, %s125
      %s140 = sphi 0, %s126
      %s144 = sphi 0, %s144
      %s146 = sphi 0, %s144
      %s147 = sphi 0, %s146
      %s161 = sphi 0, %s147
      %s165 = sphi 0, %s165
      %s167 = sphi 0, %s165
      %s168 = sphi 0, %s167
      %s182 = sphi 0, %s168
      %s186 = sphi 0, %s186
      %s188 = sphi 0, %s186
      %s189 = sphi 0, %s188
      %s203 = sphi 0, %s189
      %s207 = sphi 0, %s207
      %s209 = sphi 0, %s207
      %s210 = sphi 0, %s209
      %s224 = sphi 0, %s210
      %s228 = sphi 0, %s228
      %s230 = sphi 0, %s228
      %s231 = sphi 0, %s230
      %s245 = sphi 0, %s231
      %s249 = sphi 0, %s249
      %s251 = sphi 0, %s249
      %s252 = sphi 0, %s251
      %s266 = sphi 0, %s252
      %s270 = sphi 0, %s270
      %s272 = sphi 0, %s270
      %s273 = sphi 0, %s272
      %s287 = sphi 0, %s273
      %s291 = sphi 0, %s291
      %s293 = sphi 0, %s291
      %s294 = sphi 0, %s293
      %s308 = sphi 0, %s294
      %s312 = sphi 0, %s312
      %s314 = sphi 0, %s312
      %s315 = sphi 0, %s314
      %s329 = sphi 0, %s315
      %s333 = sphi 0, %s333
      %s335 = sphi 0, %s333
      %s336 = sphi 0, %s335
      %s350 = sphi 0, %s336
      %s354 = sphi 0, %s354
      %s356 = sphi 0, %s354
      %s357 = sphi 0, %s356
      %s371 = sphi 0, %s357
      %s375 = sphi 0, %s375
      %s377 = sphi 0, %s375
      %s378 = sphi 0, %s377
      %s392 = sphi 0, %s378
      %s398 = sphi 0, %s400
      %s401 = sphi 0, %s398
      %s402 = sphi 0, %s401
      %s418 = sphi 0, %s402
    $region4: #{tpu_custom_call.1} parent=1 // loop_header_branch
      %29 = sbr.rel (%p27) target = $region8
    $region5: #{tpu_custom_call.1} parent=1 // loop_body
      %s31 = ssub.s32 %s26, 1
      %s32 = ssub.s32 %s26, 2
      %s33 = sadd.s32 %s26, 1
      %s34 = ssub.s32 %s26, %s33
      %p35 = scmp.eq.s32.totalorder %s34, 0
      %s37 = sadd.s32 %s36, 1
      %s38 = scalar_select %p35, %s36, %s37
      %p41 = pneg %p35
      %p42 = scmp.eq.s32.totalorder %s26, 1
      %p43 = por %p41, %p42
      %p44 = scmp.ne.s32.totalorder %s36, %s39
      %p45 = scmp.eq.s32.totalorder %s26, 0
      %p46 = por %p44, %p45
      %p47 = scmp.ne.s32.totalorder %s36, %s39
      %p48 = scmp.eq.s32.totalorder %s31, 1
      %p49 = por %p47, %p48
      %p50 = scmp.ne.s32.totalorder %s39, %s40
      %p51 = scmp.eq.s32.totalorder %s31, 0
      %p52 = por %p50, %p51
      %p53 = scmp.ne.s32.totalorder %s39, %s40
      %p54 = scmp.eq.s32.totalorder %s32, 1
      %p55 = por %p53, %p54
      %p57 = scmp.ne.s32.totalorder %s40, %s56
      %p58 = scmp.eq.s32.totalorder %s32, 0
      %p59 = por %p57, %p58
      %s61 = sadd.s32 %s60, 1
      %p64 = scmp.eq.s32.totalorder %s26, 1
      %p65 = scmp.ne.s32.totalorder %s60, %s62
      %p66 = scmp.eq.s32.totalorder %s26, 0
      %p67 = por %p65, %p66
      %p68 = scmp.ne.s32.totalorder %s60, %s62
      %p69 = scmp.eq.s32.totalorder %s31, 1
      %p70 = por %p68, %p69
      %p71 = scmp.ne.s32.totalorder %s62, %s63
      %p72 = scmp.eq.s32.totalorder %s31, 0
      %p73 = por %p71, %p72
      %p74 = scmp.ne.s32.totalorder %s62, %s63
      %p75 = scmp.eq.s32.totalorder %s32, 1
      %p76 = por %p74, %p75
      %p78 = scmp.ne.s32.totalorder %s63, %s77
      %p79 = scmp.eq.s32.totalorder %s32, 0
      %p80 = por %p78, %p79
      %s82 = sadd.s32 %s81, 1
      %p85 = scmp.eq.s32.totalorder %s26, 1
      %p86 = scmp.ne.s32.totalorder %s81, %s83
      %p87 = scmp.eq.s32.totalorder %s26, 0
      %p88 = por %p86, %p87
      %p89 = scmp.ne.s32.totalorder %s81, %s83
      %p90 = scmp.eq.s32.totalorder %s31, 1
      %p91 = por %p89, %p90
      %p92 = scmp.ne.s32.totalorder %s83, %s84
      %p93 = scmp.eq.s32.totalorder %s31, 0
      %p94 = por %p92, %p93
      %p95 = scmp.ne.s32.totalorder %s83, %s84
      %p96 = scmp.eq.s32.totalorder %s32, 1
      %p97 = por %p95, %p96
      %p99 = scmp.ne.s32.totalorder %s84, %s98
      %p100 = scmp.eq.s32.totalorder %s32, 0
      %p101 = por %p99, %p100
      %s103 = sadd.s32 %s102, 1
      %p106 = scmp.eq.s32.totalorder %s26, 1
      %p107 = scmp.ne.s32.totalorder %s102, %s104
      %p108 = scmp.eq.s32.totalorder %s26, 0
      %p109 = por %p107, %p108
      %p110 = scmp.ne.s32.totalorder %s102, %s104
      %p111 = scmp.eq.s32.totalorder %s31, 1
      %p112 = por %p110, %p111
      %p113 = scmp.ne.s32.totalorder %s104, %s105
      %p114 = scmp.eq.s32.totalorder %s31, 0
      %p115 = por %p113, %p114
      %p116 = scmp.ne.s32.totalorder %s104, %s105
      %p117 = scmp.eq.s32.totalorder %s32, 1
      %p118 = por %p116, %p117
      %p120 = scmp.ne.s32.totalorder %s105, %s119
      %p121 = scmp.eq.s32.totalorder %s32, 0
      %p122 = por %p120, %p121
      %s124 = sadd.s32 %s123, 1
      %p127 = scmp.eq.s32.totalorder %s26, 1
      %p128 = scmp.ne.s32.totalorder %s123, %s125
      %p129 = scmp.eq.s32.totalorder %s26, 0
      %p130 = por %p128, %p129
      %p131 = scmp.ne.s32.totalorder %s123, %s125
      %p132 = scmp.eq.s32.totalorder %s31, 1
      %p133 = por %p131, %p132
      %p134 = scmp.ne.s32.totalorder %s125, %s126
      %p135 = scmp.eq.s32.totalorder %s31, 0
      %p136 = por %p134, %p135
      %p137 = scmp.ne.s32.totalorder %s125, %s126
      %p138 = scmp.eq.s32.totalorder %s32, 1
      %p139 = por %p137, %p138
      %p141 = scmp.ne.s32.totalorder %s126, %s140
      %p142 = scmp.eq.s32.totalorder %s32, 0
      %p143 = por %p141, %p142
      %s145 = sadd.s32 %s144, 1
      %p148 = scmp.eq.s32.totalorder %s26, 1
      %p149 = scmp.ne.s32.totalorder %s144, %s146
      %p150 = scmp.eq.s32.totalorder %s26, 0
      %p151 = por %p149, %p150
      %p152 = scmp.ne.s32.totalorder %s144, %s146
      %p153 = scmp.eq.s32.totalorder %s31, 1
      %p154 = por %p152, %p153
      %p155 = scmp.ne.s32.totalorder %s146, %s147
      %p156 = scmp.eq.s32.totalorder %s31, 0
      %p157 = por %p155, %p156
      %p158 = scmp.ne.s32.totalorder %s146, %s147
      %p159 = scmp.eq.s32.totalorder %s32, 1
      %p160 = por %p158, %p159
      %p162 = scmp.ne.s32.totalorder %s147, %s161
      %p163 = scmp.eq.s32.totalorder %s32, 0
      %p164 = por %p162, %p163
      %s166 = sadd.s32 %s165, 1
      %p169 = scmp.eq.s32.totalorder %s26, 1
      %p170 = scmp.ne.s32.totalorder %s165, %s167
      %p171 = scmp.eq.s32.totalorder %s26, 0
      %p172 = por %p170, %p171
      %p173 = scmp.ne.s32.totalorder %s165, %s167
      %p174 = scmp.eq.s32.totalorder %s31, 1
      %p175 = por %p173, %p174
      %p176 = scmp.ne.s32.totalorder %s167, %s168
      %p177 = scmp.eq.s32.totalorder %s31, 0
      %p178 = por %p176, %p177
      %p179 = scmp.ne.s32.totalorder %s167, %s168
      %p180 = scmp.eq.s32.totalorder %s32, 1
      %p181 = por %p179, %p180
      %p183 = scmp.ne.s32.totalorder %s168, %s182
      %p184 = scmp.eq.s32.totalorder %s32, 0
      %p185 = por %p183, %p184
      %s187 = sadd.s32 %s186, 1
      %p190 = scmp.eq.s32.totalorder %s26, 1
      %p191 = scmp.ne.s32.totalorder %s186, %s188
      %p192 = scmp.eq.s32.totalorder %s26, 0
      %p193 = por %p191, %p192
      %p194 = scmp.ne.s32.totalorder %s186, %s188
      %p195 = scmp.eq.s32.totalorder %s31, 1
      %p196 = por %p194, %p195
      %p197 = scmp.ne.s32.totalorder %s188, %s189
      %p198 = scmp.eq.s32.totalorder %s31, 0
      %p199 = por %p197, %p198
      %p200 = scmp.ne.s32.totalorder %s188, %s189
      %p201 = scmp.eq.s32.totalorder %s32, 1
      %p202 = por %p200, %p201
      %p204 = scmp.ne.s32.totalorder %s189, %s203
      %p205 = scmp.eq.s32.totalorder %s32, 0
      %p206 = por %p204, %p205
      %s208 = sadd.s32 %s207, 1
      %p211 = scmp.eq.s32.totalorder %s26, 1
      %p212 = scmp.ne.s32.totalorder %s207, %s209
      %p213 = scmp.eq.s32.totalorder %s26, 0
      %p214 = por %p212, %p213
      %p215 = scmp.ne.s32.totalorder %s207, %s209
      %p216 = scmp.eq.s32.totalorder %s31, 1
      %p217 = por %p215, %p216
      %p218 = scmp.ne.s32.totalorder %s209, %s210
      %p219 = scmp.eq.s32.totalorder %s31, 0
      %p220 = por %p218, %p219
      %p221 = scmp.ne.s32.totalorder %s209, %s210
      %p222 = scmp.eq.s32.totalorder %s32, 1
      %p223 = por %p221, %p222
      %p225 = scmp.ne.s32.totalorder %s210, %s224
      %p226 = scmp.eq.s32.totalorder %s32, 0
      %p227 = por %p225, %p226
      %s229 = sadd.s32 %s228, 1
      %p232 = scmp.eq.s32.totalorder %s26, 1
      %p233 = scmp.ne.s32.totalorder %s228, %s230
      %p234 = scmp.eq.s32.totalorder %s26, 0
      %p235 = por %p233, %p234
      %p236 = scmp.ne.s32.totalorder %s228, %s230
      %p237 = scmp.eq.s32.totalorder %s31, 1
      %p238 = por %p236, %p237
      %p239 = scmp.ne.s32.totalorder %s230, %s231
      %p240 = scmp.eq.s32.totalorder %s31, 0
      %p241 = por %p239, %p240
      %p242 = scmp.ne.s32.totalorder %s230, %s231
      %p243 = scmp.eq.s32.totalorder %s32, 1
      %p244 = por %p242, %p243
      %p246 = scmp.ne.s32.totalorder %s231, %s245
      %p247 = scmp.eq.s32.totalorder %s32, 0
      %p248 = por %p246, %p247
      %s250 = sadd.s32 %s249, 1
      %p253 = scmp.eq.s32.totalorder %s26, 1
      %p254 = scmp.ne.s32.totalorder %s249, %s251
      %p255 = scmp.eq.s32.totalorder %s26, 0
      %p256 = por %p254, %p255
      %p257 = scmp.ne.s32.totalorder %s249, %s251
      %p258 = scmp.eq.s32.totalorder %s31, 1
      %p259 = por %p257, %p258
      %p260 = scmp.ne.s32.totalorder %s251, %s252
      %p261 = scmp.eq.s32.totalorder %s31, 0
      %p262 = por %p260, %p261
      %p263 = scmp.ne.s32.totalorder %s251, %s252
      %p264 = scmp.eq.s32.totalorder %s32, 1
      %p265 = por %p263, %p264
      %p267 = scmp.ne.s32.totalorder %s252, %s266
      %p268 = scmp.eq.s32.totalorder %s32, 0
      %p269 = por %p267, %p268
      %s271 = sadd.s32 %s270, 1
      %p274 = scmp.eq.s32.totalorder %s26, 1
      %p275 = scmp.ne.s32.totalorder %s270, %s272
      %p276 = scmp.eq.s32.totalorder %s26, 0
      %p277 = por %p275, %p276
      %p278 = scmp.ne.s32.totalorder %s270, %s272
      %p279 = scmp.eq.s32.totalorder %s31, 1
      %p280 = por %p278, %p279
      %p281 = scmp.ne.s32.totalorder %s272, %s273
      %p282 = scmp.eq.s32.totalorder %s31, 0
      %p283 = por %p281, %p282
      %p284 = scmp.ne.s32.totalorder %s272, %s273
      %p285 = scmp.eq.s32.totalorder %s32, 1
      %p286 = por %p284, %p285
      %p288 = scmp.ne.s32.totalorder %s273, %s287
      %p289 = scmp.eq.s32.totalorder %s32, 0
      %p290 = por %p288, %p289
      %s292 = sadd.s32 %s291, 1
      %p295 = scmp.eq.s32.totalorder %s26, 1
      %p296 = scmp.ne.s32.totalorder %s291, %s293
      %p297 = scmp.eq.s32.totalorder %s26, 0
      %p298 = por %p296, %p297
      %p299 = scmp.ne.s32.totalorder %s291, %s293
      %p300 = scmp.eq.s32.totalorder %s31, 1
      %p301 = por %p299, %p300
      %p302 = scmp.ne.s32.totalorder %s293, %s294
      %p303 = scmp.eq.s32.totalorder %s31, 0
      %p304 = por %p302, %p303
      %p305 = scmp.ne.s32.totalorder %s293, %s294
      %p306 = scmp.eq.s32.totalorder %s32, 1
      %p307 = por %p305, %p306
      %p309 = scmp.ne.s32.totalorder %s294, %s308
      %p310 = scmp.eq.s32.totalorder %s32, 0
      %p311 = por %p309, %p310
      %s313 = sadd.s32 %s312, 1
      %p316 = scmp.eq.s32.totalorder %s26, 1
      %p317 = scmp.ne.s32.totalorder %s312, %s314
      %p318 = scmp.eq.s32.totalorder %s26, 0
      %p319 = por %p317, %p318
      %p320 = scmp.ne.s32.totalorder %s312, %s314
      %p321 = scmp.eq.s32.totalorder %s31, 1
      %p322 = por %p320, %p321
      %p323 = scmp.ne.s32.totalorder %s314, %s315
      %p324 = scmp.eq.s32.totalorder %s31, 0
      %p325 = por %p323, %p324
      %p326 = scmp.ne.s32.totalorder %s314, %s315
      %p327 = scmp.eq.s32.totalorder %s32, 1
      %p328 = por %p326, %p327
      %p330 = scmp.ne.s32.totalorder %s315, %s329
      %p331 = scmp.eq.s32.totalorder %s32, 0
      %p332 = por %p330, %p331
      %s334 = sadd.s32 %s333, 1
      %p337 = scmp.eq.s32.totalorder %s26, 1
      %p338 = scmp.ne.s32.totalorder %s333, %s335
      %p339 = scmp.eq.s32.totalorder %s26, 0
      %p340 = por %p338, %p339
      %p341 = scmp.ne.s32.totalorder %s333, %s335
      %p342 = scmp.eq.s32.totalorder %s31, 1
      %p343 = por %p341, %p342
      %p344 = scmp.ne.s32.totalorder %s335, %s336
      %p345 = scmp.eq.s32.totalorder %s31, 0
      %p346 = por %p344, %p345
      %p347 = scmp.ne.s32.totalorder %s335, %s336
      %p348 = scmp.eq.s32.totalorder %s32, 1
      %p349 = por %p347, %p348
      %p351 = scmp.ne.s32.totalorder %s336, %s350
      %p352 = scmp.eq.s32.totalorder %s32, 0
      %p353 = por %p351, %p352
      %s355 = sadd.s32 %s354, 1
      %p358 = scmp.eq.s32.totalorder %s26, 1
      %p359 = scmp.ne.s32.totalorder %s354, %s356
      %p360 = scmp.eq.s32.totalorder %s26, 0
      %p361 = por %p359, %p360
      %p362 = scmp.ne.s32.totalorder %s354, %s356
      %p363 = scmp.eq.s32.totalorder %s31, 1
      %p364 = por %p362, %p363
      %p365 = scmp.ne.s32.totalorder %s356, %s357
      %p366 = scmp.eq.s32.totalorder %s31, 0
      %p367 = por %p365, %p366
      %p368 = scmp.ne.s32.totalorder %s356, %s357
      %p369 = scmp.eq.s32.totalorder %s32, 1
      %p370 = por %p368, %p369
      %p372 = scmp.ne.s32.totalorder %s357, %s371
      %p373 = scmp.eq.s32.totalorder %s32, 0
      %p374 = por %p372, %p373
      %s376 = sadd.s32 %s375, 1
      %p379 = scmp.eq.s32.totalorder %s26, 1
      %p380 = scmp.ne.s32.totalorder %s375, %s377
      %p381 = scmp.eq.s32.totalorder %s26, 0
      %p382 = por %p380, %p381
      %p383 = scmp.ne.s32.totalorder %s375, %s377
      %p384 = scmp.eq.s32.totalorder %s31, 1
      %p385 = por %p383, %p384
      %p386 = scmp.ne.s32.totalorder %s377, %s378
      %p387 = scmp.eq.s32.totalorder %s31, 0
      %p388 = por %p386, %p387
      %p389 = scmp.ne.s32.totalorder %s377, %s378
      %p390 = scmp.eq.s32.totalorder %s32, 1
      %p391 = por %p389, %p390
      %p393 = scmp.ne.s32.totalorder %s378, %s392
      %p394 = scmp.eq.s32.totalorder %s32, 0
      %p395 = por %p393, %p394
      %s396 = ssub.s32 %s26, %s33
      %p397 = scmp.eq.s32.totalorder %s396, 0
      %s399 = sadd.s32 %s398, 1
      %s400 = scalar_select %p397, %s398, %s399
      %p403 = pneg %p397
      %p404 = scmp.eq.s32.totalorder %s26, 1
      %p405 = por %p403, %p404
      %p406 = scmp.ne.s32.totalorder %s398, %s401
      %p407 = scmp.eq.s32.totalorder %s26, 0
      %p408 = por %p406, %p407
      %p409 = scmp.ne.s32.totalorder %s398, %s401
      %p410 = scmp.eq.s32.totalorder %s31, 1
      %p411 = por %p409, %p410
      %p412 = scmp.ne.s32.totalorder %s401, %s402
      %p413 = scmp.eq.s32.totalorder %s31, 0
      %p414 = por %p412, %p413
      %p415 = scmp.ne.s32.totalorder %s401, %s402
      %p416 = scmp.eq.s32.totalorder %s32, 1
      %p417 = por %p415, %p416
      %p419 = scmp.ne.s32.totalorder %s402, %s418
      %p420 = scmp.eq.s32.totalorder %s32, 0
      %p421 = por %p419, %p420
      %p422 = scmp.le.s32.totalorder 1, %s26
      %p423 = scmp.lt.s32.totalorder %s26, 3
      %p424 = pnand %p422, %p423
      %p425 = pneg %p424
      // Predicated region
      $region9: #{tpu_custom_call.1} parent=5 // pred_check
        _
      $region10: #{tpu_custom_call.1} parent=5 // pred_check_branch
        %427 = sbr.rel (%p424) target = $region12
      $region11: #{tpu_custom_call.1} parent=5 // pred_region
        %s428 = ssub.s32 %s26, 1
        // Predicated region
        $region13: #{tpu_custom_call.1} parent=11 // pred_check
          %p429 = pneg %p73
        $region14: #{tpu_custom_call.1} parent=11 // pred_check_branch
          %431 = sbr.rel (%p429) target = $region16
        $region15: #{tpu_custom_call.1} parent=11 // pred_region
          _
        $region16: #{tpu_custom_call.1} parent=11 // pred_fallthru
          _
        // Predicated region
        $region17: #{tpu_custom_call.1} parent=11 // pred_check
          %p432 = pneg %p94
        $region18: #{tpu_custom_call.1} parent=11 // pred_check_branch
          %434 = sbr.rel (%p432) target = $region20
        $region19: #{tpu_custom_call.1} parent=11 // pred_region
          _
        $region20: #{tpu_custom_call.1} parent=11 // pred_fallthru
          _
        // Predicated region
        $region21: #{tpu_custom_call.1} parent=11 // pred_check
          %p435 = pneg %p115
        $region22: #{tpu_custom_call.1} parent=11 // pred_check_branch
          %437 = sbr.rel (%p435) target = $region24
        $region23: #{tpu_custom_call.1} parent=11 // pred_region
          _
        $region24: #{tpu_custom_call.1} parent=11 // pred_fallthru
          _
        // Predicated region
        $region25: #{tpu_custom_call.1} parent=11 // pred_check
          %p438 = pneg %p136
        $region26: #{tpu_custom_call.1} parent=11 // pred_check_branch
          %440 = sbr.rel (%p438) target = $region28
        $region27: #{tpu_custom_call.1} parent=11 // pred_region
          _
        $region28: #{tpu_custom_call.1} parent=11 // pred_fallthru
          _
        // Predicated region
        $region29: #{tpu_custom_call.1} parent=11 // pred_check
          %p441 = pneg %p157
        $region30: #{tpu_custom_call.1} parent=11 // pred_check_branch
          %443 = sbr.rel (%p441) target = $region32
        $region31: #{tpu_custom_call.1} parent=11 // pred_region
          _
        $region32: #{tpu_custom_call.1} parent=11 // pred_fallthru
          _
        // Predicated region
        $region33: #{tpu_custom_call.1} parent=11 // pred_check
          %p444 = pneg %p178
        $region34: #{tpu_custom_call.1} parent=11 // pred_check_branch
          %446 = sbr.rel (%p444) target = $region36
        $region35: #{tpu_custom_call.1} parent=11 // pred_region
          _
        $region36: #{tpu_custom_call.1} parent=11 // pred_fallthru
          _
        // Predicated region
        $region37: #{tpu_custom_call.1} parent=11 // pred_check
          %p447 = pneg %p199
        $region38: #{tpu_custom_call.1} parent=11 // pred_check_branch
          %449 = sbr.rel (%p447) target = $region40
        $region39: #{tpu_custom_call.1} parent=11 // pred_region
          _
        $region40: #{tpu_custom_call.1} parent=11 // pred_fallthru
          _
        // Predicated region
        $region41: #{tpu_custom_call.1} parent=11 // pred_check
          %p450 = pneg %p220
        $region42: #{tpu_custom_call.1} parent=11 // pred_check_branch
          %452 = sbr.rel (%p450) target = $region44
        $region43: #{tpu_custom_call.1} parent=11 // pred_region
          _
        $region44: #{tpu_custom_call.1} parent=11 // pred_fallthru
          _
        // Predicated region
        $region45: #{tpu_custom_call.1} parent=11 // pred_check
          %p453 = pneg %p241
        $region46: #{tpu_custom_call.1} parent=11 // pred_check_branch
          %455 = sbr.rel (%p453) target = $region48
        $region47: #{tpu_custom_call.1} parent=11 // pred_region
          _
        $region48: #{tpu_custom_call.1} parent=11 // pred_fallthru
          _
        // Predicated region
        $region49: #{tpu_custom_call.1} parent=11 // pred_check
          %p456 = pneg %p262
        $region50: #{tpu_custom_call.1} parent=11 // pred_check_branch
          %458 = sbr.rel (%p456) target = $region52
        $region51: #{tpu_custom_call.1} parent=11 // pred_region
          _
        $region52: #{tpu_custom_call.1} parent=11 // pred_fallthru
          _
        // Predicated region
        $region53: #{tpu_custom_call.1} parent=11 // pred_check
          %p459 = pneg %p283
        $region54: #{tpu_custom_call.1} parent=11 // pred_check_branch
          %461 = sbr.rel (%p459) target = $region56
        $region55: #{tpu_custom_call.1} parent=11 // pred_region
          _
        $region56: #{tpu_custom_call.1} parent=11 // pred_fallthru
          _
        // Predicated region
        $region57: #{tpu_custom_call.1} parent=11 // pred_check
          %p462 = pneg %p304
        $region58: #{tpu_custom_call.1} parent=11 // pred_check_branch
          %464 = sbr.rel (%p462) target = $region60
        $region59: #{tpu_custom_call.1} parent=11 // pred_region
          _
        $region60: #{tpu_custom_call.1} parent=11 // pred_fallthru
          _
        // Predicated region
        $region61: #{tpu_custom_call.1} parent=11 // pred_check
          %p465 = pneg %p325
        $region62: #{tpu_custom_call.1} parent=11 // pred_check_branch
          %467 = sbr.rel (%p465) target = $region64
        $region63: #{tpu_custom_call.1} parent=11 // pred_region
          _
        $region64: #{tpu_custom_call.1} parent=11 // pred_fallthru
          _
        // Predicated region
        $region65: #{tpu_custom_call.1} parent=11 // pred_check
          %p468 = pneg %p346
        $region66: #{tpu_custom_call.1} parent=11 // pred_check_branch
          %470 = sbr.rel (%p468) target = $region68
        $region67: #{tpu_custom_call.1} parent=11 // pred_region
          _
        $region68: #{tpu_custom_call.1} parent=11 // pred_fallthru
          _
        // Predicated region
        $region69: #{tpu_custom_call.1} parent=11 // pred_check
          %p471 = pneg %p367
        $region70: #{tpu_custom_call.1} parent=11 // pred_check_branch
          %473 = sbr.rel (%p471) target = $region72
        $region71: #{tpu_custom_call.1} parent=11 // pred_region
          _
        $region72: #{tpu_custom_call.1} parent=11 // pred_fallthru
          _
        // Predicated region
        $region73: #{tpu_custom_call.1} parent=11 // pred_check
          %p474 = pneg %p388
        $region74: #{tpu_custom_call.1} parent=11 // pred_check_branch
          %476 = sbr.rel (%p474) target = $region76
        $region75: #{tpu_custom_call.1} parent=11 // pred_region
          _
        $region76: #{tpu_custom_call.1} parent=11 // pred_fallthru
          _
      $region12: #{tpu_custom_call.1} parent=5 // pred_fallthru
        _
      %p477 = scmp.lt.s32.totalorder %s26, 2
      // Predicated region
      $region77: #{tpu_custom_call.1} parent=5 // pred_check
        %p478 = pneg %p477
      $region78: #{tpu_custom_call.1} parent=5 // pred_check_branch
        %480 = sbr.rel (%p478) target = $region80
      $region79: #{tpu_custom_call.1} parent=5 // pred_region
        // Predicated region
        $region81: #{tpu_custom_call.1} parent=79 // pred_check
          %p481 = pneg %p46
        $region82: #{tpu_custom_call.1} parent=79 // pred_check_branch
          %483 = sbr.rel (%p481) target = $region84
        $region83: #{tpu_custom_call.1} parent=79 // pred_region
          %p484 = scmp.lt.s32.totalorder %s26, 1
          %s485 = scalar_select %p484, %s26, 1
          %s486 = smul.addr %s485, 8
          %s487 = scalar_lea.vmem %s0, %s486
        $region84: #{tpu_custom_call.1} parent=79 // pred_fallthru
          _
      $region80: #{tpu_custom_call.1} parent=5 // pred_fallthru
        _
      %p488 = scmp.le.s32.totalorder 1, %s26
      %p489 = scmp.lt.s32.totalorder %s26, 3
      %p490 = pnand %p488, %p489
      %p491 = pneg %p490
      // Predicated region
      $region85: #{tpu_custom_call.1} parent=5 // pred_check
        _
      $region86: #{tpu_custom_call.1} parent=5 // pred_check_branch
        %493 = sbr.rel (%p490) target = $region88
      $region87: #{tpu_custom_call.1} parent=5 // pred_region
        %s494 = ssub.s32 %s26, 1
        %p495 = scmp.lt.s32.totalorder %s31, 1
        %s496 = scalar_select %p495, %s31, 1
        %s497 = smul.addr %s496, 8
        %s498 = scalar_lea.vmem %s0, %s497
        %p499 = pneg %p52
        %p500 = pneg %p49
        %p501 = pneg %p73
        %p502 = pneg %p70
        %p503 = pneg %p94
        %p504 = pneg %p91
        %p505 = pneg %p115
        %p506 = pneg %p112
        %p507 = pneg %p136
        %p508 = pneg %p133
        %p509 = pneg %p157
        %p510 = pneg %p154
        %p511 = pneg %p178
        %p512 = pneg %p175
        %p513 = pneg %p199
        %p514 = pneg %p196
        %p515 = pneg %p220
        %p516 = pneg %p217
        %p517 = pneg %p241
        %p518 = pneg %p238
        %p519 = pneg %p262
        %p520 = pneg %p259
        %p521 = pneg %p283
        %p522 = pneg %p280
        %p523 = pneg %p304
        %p524 = pneg %p301
        %p525 = pneg %p325
        %p526 = pneg %p322
        %p527 = pneg %p346
        %p528 = pneg %p343
        %p529 = pneg %p367
        %p530 = pneg %p364
        %p531 = pneg %p388
        %p532 = pneg %p385
        %p533 = pneg %p414
        %p534 = pneg %p411
        %s535 = sand.u32 %s401, 1
        %s536 = scalar_lea.sflag [#allocation3], %s535
        %s537 = sand.u32 %s401, 1
        %s538 = smul.addr %s537, 8
        %s539 = scalar_lea.vmem [#allocation2], %s538
        %p540 = scmp.lt.s32.totalorder %s31, 1
        %s541 = scalar_select %p540, %s31, 1
        %s542 = smul.addr %s541, 8
        %s543 = scalar_lea.vmem %s0, %s542
        %v545 = vld [vmem:[%s543] sm:$0xff]
        %v546 = vpack.c.bf16 %v545, %v545
        %v547 = vld [vmem:[%s1] sm:$0xf]
        %v548 = vld [vmem:[%s1 + $0x4] sm:$0xf]
        %v549 = vld [vmem:[%s1 + $0x8] sm:$0xf]
        %v550 = vld [vmem:[%s1 + $0xc] sm:$0xf]
        %v551 = vld [vmem:[%s1 + $0x10] sm:$0xf]
        %v552 = vld [vmem:[%s1 + $0x14] sm:$0xf]
        %v553 = vld [vmem:[%s1 + $0x18] sm:$0xf]
        %v554 = vld [vmem:[%s1 + $0x1c] sm:$0xf]
        %v555 = vld [vmem:[%s1 + $0x20] sm:$0xf]
        %v556 = vld [vmem:[%s1 + $0x24] sm:$0xf]
        %v557 = vld [vmem:[%s1 + $0x28] sm:$0xf]
        %v558 = vld [vmem:[%s1 + $0x2c] sm:$0xf]
        %v559 = vld [vmem:[%s1 + $0x30] sm:$0xf]
        %v560 = vld [vmem:[%s1 + $0x34] sm:$0xf]
        %v561 = vld [vmem:[%s1 + $0x38] sm:$0xf]
        %v562 = vld [vmem:[%s1 + $0x3c] sm:$0xf]
        %v563 = vld [vmem:[%s2] sm:$0x1]
        %v564 = vld [vmem:[%s2 + $0x1] sm:$0x1]
        %v565 = vld [vmem:[%s2 + $0x2] sm:$0x1]
        %v566 = vld [vmem:[%s2 + $0x3] sm:$0x1]
        %v571 = vlaneseq
        %v572 = vshrl.u32 %v571, 7
        %v573 = vsub.s32 0, %v572
        %v574 = vrot.slane %v563, %v573
        %v575 = vlaneseq
        %v576 = vshrl.u32 %v575, 7
        %v577 = vsub.s32 0, %v576
        %v578 = vrot.slane %v564, %v577
        %v579 = vlaneseq
        %v580 = vshrl.u32 %v579, 7
        %v581 = vsub.s32 0, %v580
        %v582 = vrot.slane %v565, %v581
        %v583 = vlaneseq
        %v584 = vshrl.u32 %v583, 7
        %v585 = vsub.s32 0, %v584
        %v586 = vrot.slane %v566, %v585
        %v595 = vunpack.c.l.b16 %v547
        %v596 = vunpack.c.l.b16 %v548
        %v597 = vunpack.c.l.b16 %v549
        %v598 = vunpack.c.l.b16 %v550
        %v599 = vpack.c.b16 %v596, %v595
        %v600 = vpack.c.b16 %v598, %v597
        %vm603 = vcmask 261120
        %v605 = vsel %vm603, %v546, 0
        %607 = vmatprep.subr.bf16.mxu0 0
        %608 = vmatpush1.bf16.msra.mxu0 %v599
        %609 = vmatprep.subr.bf16.mxu0 0
        %610 = vmatpush1.bf16.msra.mxu0 %v600
        %611 = vmatprep.subr.bf16.mxu0 0
        %612 = vmatpush1.bf16.msra.mxu0 0
        %613 = vmatprep.subr.bf16.mxu0 0
        %614 = vmatpush1.bf16.msra.mxu0 0
        %615 = vmatprep.subr.bf16.mxu0 0
        %616 = vmatpush1.bf16.msra.mxu0 0
        %617 = vmatprep.subr.bf16.mxu0 0
        %618 = vmatpush1.bf16.msra.mxu0 0
        %619 = vmatprep.subr.bf16.mxu0 0
        %620 = vmatpush1.bf16.msra.mxu0 0
        %621 = vmatprep.subr.bf16.mxu0 0
        %622 = vmatpush1.bf16.msra.mxu0 0
        %623 = vmatprep.subr.bf16.mxu0 0
        %624 = vmatpush1.bf16.msra.mxu0 0
        %625 = vmatprep.subr.bf16.mxu0 0
        %626 = vmatpush1.bf16.msra.mxu0 0
        %627 = vmatprep.subr.bf16.mxu0 0
        %628 = vmatpush1.bf16.msra.mxu0 0
        %629 = vmatprep.subr.bf16.mxu0 0
        %630 = vmatpush1.bf16.msra.mxu0 0
        %631 = vmatprep.subr.bf16.mxu0 0
        %632 = vmatpush1.bf16.msra.mxu0 0
        %633 = vmatprep.subr.bf16.mxu0 0
        %634 = vmatpush1.bf16.msra.mxu0 0
        %635 = vmatprep.subr.bf16.mxu0 0
        %636 = vmatpush1.bf16.msra.mxu0 0
        %637 = vmatprep.subr.bf16.mxu0 0
        %638 = vmatpush1.bf16.msra.mxu0 0
        %639 = vmatprep.mubr.bf16.mxu0 0
        %640 = vmatmul.mubr.bf16.gmra.mrb[0].mxu0 %v605
        %v641 = vpop.f32.mrb[0].mxu0
        %v642 = vadd.f32 %v574, %v641
        %v643 = vpop.f32.mrb[0].mxu0
        %v644 = vpop.f32.mrb[0].mxu0
        %v645 = vpop.f32.mrb[0].mxu0
        %646 = vdwg.mxu0
        %v651 = vunpack.c.l.b16 %v551
        %v652 = vunpack.c.l.b16 %v552
        %v653 = vunpack.c.l.b16 %v553
        %v654 = vunpack.c.l.b16 %v554
        %v655 = vpack.c.b16 %v652, %v651
        %v656 = vpack.c.b16 %v654, %v653
        %659 = vmatprep.subr.bf16.mxu0 0
        %660 = vmatpush1.bf16.msra.mxu0 %v655
        %661 = vmatprep.subr.bf16.mxu0 0
        %662 = vmatpush1.bf16.msra.mxu0 %v656
        %663 = vmatprep.subr.bf16.mxu0 0
        %664 = vmatpush1.bf16.msra.mxu0 0
        %665 = vmatprep.subr.bf16.mxu0 0
        %666 = vmatpush1.bf16.msra.mxu0 0
        %667 = vmatprep.subr.bf16.mxu0 0
        %668 = vmatpush1.bf16.msra.mxu0 0
        %669 = vmatprep.subr.bf16.mxu0 0
        %670 = vmatpush1.bf16.msra.mxu0 0
        %671 = vmatprep.subr.bf16.mxu0 0
        %672 = vmatpush1.bf16.msra.mxu0 0
        %673 = vmatprep.subr.bf16.mxu0 0
        %674 = vmatpush1.bf16.msra.mxu0 0
        %675 = vmatprep.subr.bf16.mxu0 0
        %676 = vmatpush1.bf16.msra.mxu0 0
        %677 = vmatprep.subr.bf16.mxu0 0
        %678 = vmatpush1.bf16.msra.mxu0 0
        %679 = vmatprep.subr.bf16.mxu0 0
        %680 = vmatpush1.bf16.msra.mxu0 0
        %681 = vmatprep.subr.bf16.mxu0 0
        %682 = vmatpush1.bf16.msra.mxu0 0
        %683 = vmatprep.subr.bf16.mxu0 0
        %684 = vmatpush1.bf16.msra.mxu0 0
        %685 = vmatprep.subr.bf16.mxu0 0
        %686 = vmatpush1.bf16.msra.mxu0 0
        %687 = vmatprep.subr.bf16.mxu0 0
        %688 = vmatpush1.bf16.msra.mxu0 0
        %689 = vmatprep.subr.bf16.mxu0 0
        %690 = vmatpush1.bf16.msra.mxu0 0
        %691 = vmatprep.mubr.bf16.mxu0 0
        %692 = vmatmul.mubr.bf16.gmra.mrb[0].mxu0 %v605
        %v693 = vpop.f32.mrb[0].mxu0
        %v694 = vadd.f32 %v578, %v693
        %v695 = vpop.f32.mrb[0].mxu0
        %v696 = vpop.f32.mrb[0].mxu0
        %v697 = vpop.f32.mrb[0].mxu0
        %698 = vdwg.mxu0
        %v703 = vunpack.c.l.b16 %v555
        %v704 = vunpack.c.l.b16 %v556
        %v705 = vunpack.c.l.b16 %v557
        %v706 = vunpack.c.l.b16 %v558
        %v707 = vpack.c.b16 %v704, %v703
        %v708 = vpack.c.b16 %v706, %v705
        %711 = vmatprep.subr.bf16.mxu0 0
        %712 = vmatpush1.bf16.msra.mxu0 %v707
        %713 = vmatprep.subr.bf16.mxu0 0
        %714 = vmatpush1.bf16.msra.mxu0 %v708
        %715 = vmatprep.subr.bf16.mxu0 0
        %716 = vmatpush1.bf16.msra.mxu0 0
        %717 = vmatprep.subr.bf16.mxu0 0
        %718 = vmatpush1.bf16.msra.mxu0 0
        %719 = vmatprep.subr.bf16.mxu0 0
        %720 = vmatpush1.bf16.msra.mxu0 0
        %721 = vmatprep.subr.bf16.mxu0 0
        %722 = vmatpush1.bf16.msra.mxu0 0
        %723 = vmatprep.subr.bf16.mxu0 0
        %724 = vmatpush1.bf16.msra.mxu0 0
        %725 = vmatprep.subr.bf16.mxu0 0
        %726 = vmatpush1.bf16.msra.mxu0 0
        %727 = vmatprep.subr.bf16.mxu0 0
        %728 = vmatpush1.bf16.msra.mxu0 0
        %729 = vmatprep.subr.bf16.mxu0 0
        %730 = vmatpush1.bf16.msra.mxu0 0
        %731 = vmatprep.subr.bf16.mxu0 0
        %732 = vmatpush1.bf16.msra.mxu0 0
        %733 = vmatprep.subr.bf16.mxu0 0
        %734 = vmatpush1.bf16.msra.mxu0 0
        %735 = vmatprep.subr.bf16.mxu0 0
        %736 = vmatpush1.bf16.msra.mxu0 0
        %737 = vmatprep.subr.bf16.mxu0 0
        %738 = vmatpush1.bf16.msra.mxu0 0
        %739 = vmatprep.subr.bf16.mxu0 0
        %740 = vmatpush1.bf16.msra.mxu0 0
        %741 = vmatprep.subr.bf16.mxu0 0
        %742 = vmatpush1.bf16.msra.mxu0 0
        %743 = vmatprep.mubr.bf16.mxu0 0
        %744 = vmatmul.mubr.bf16.gmra.mrb[0].mxu0 %v605
        %v745 = vpop.f32.mrb[0].mxu0
        %v746 = vadd.f32 %v582, %v745
        %v747 = vpop.f32.mrb[0].mxu0
        %v748 = vpop.f32.mrb[0].mxu0
        %v749 = vpop.f32.mrb[0].mxu0
        %750 = vdwg.mxu0
        %v755 = vunpack.c.l.b16 %v559
        %v756 = vunpack.c.l.b16 %v560
        %v757 = vunpack.c.l.b16 %v561
        %v758 = vunpack.c.l.b16 %v562
        %v759 = vpack.c.b16 %v756, %v755
        %v760 = vpack.c.b16 %v758, %v757
        %763 = vmatprep.subr.bf16.mxu0 0
        %764 = vmatpush1.bf16.msra.mxu0 %v759
        %765 = vmatprep.subr.bf16.mxu0 0
        %766 = vmatpush1.bf16.msra.mxu0 %v760
        %767 = vmatprep.subr.bf16.mxu0 0
        %768 = vmatpush1.bf16.msra.mxu0 0
        %769 = vmatprep.subr.bf16.mxu0 0
        %770 = vmatpush1.bf16.msra.mxu0 0
        %771 = vmatprep.subr.bf16.mxu0 0
        %772 = vmatpush1.bf16.msra.mxu0 0
        %773 = vmatprep.subr.bf16.mxu0 0
        %774 = vmatpush1.bf16.msra.mxu0 0
        %775 = vmatprep.subr.bf16.mxu0 0
        %776 = vmatpush1.bf16.msra.mxu0 0
        %777 = vmatprep.subr.bf16.mxu0 0
        %778 = vmatpush1.bf16.msra.mxu0 0
        %779 = vmatprep.subr.bf16.mxu0 0
        %780 = vmatpush1.bf16.msra.mxu0 0
        %781 = vmatprep.subr.bf16.mxu0 0
        %782 = vmatpush1.bf16.msra.mxu0 0
        %783 = vmatprep.subr.bf16.mxu0 0
        %784 = vmatpush1.bf16.msra.mxu0 0
        %785 = vmatprep.subr.bf16.mxu0 0
        %786 = vmatpush1.bf16.msra.mxu0 0
        %787 = vmatprep.subr.bf16.mxu0 0
        %788 = vmatpush1.bf16.msra.mxu0 0
        %789 = vmatprep.subr.bf16.mxu0 0
        %790 = vmatpush1.bf16.msra.mxu0 0
        %791 = vmatprep.subr.bf16.mxu0 0
        %792 = vmatpush1.bf16.msra.mxu0 0
        %793 = vmatprep.subr.bf16.mxu0 0
        %794 = vmatpush1.bf16.msra.mxu0 0
        %795 = vmatprep.mubr.bf16.mxu0 0
        %796 = vmatmul.mubr.bf16.gmra.mrb[0].mxu0 %v605
        %v797 = vpop.f32.mrb[0].mxu0
        %v798 = vadd.f32 %v586, %v797
        %v799 = vpop.f32.mrb[0].mxu0
        %v800 = vpop.f32.mrb[0].mxu0
        %v801 = vpop.f32.mrb[0].mxu0
        %802 = vdwg.mxu0
        %v803 = vmul.f32 %v642, 0.35355338
        %v804 = vmul.f32 %v694, 0.35355338
        %v805 = vmul.f32 %v746, 0.35355338
        %v806 = vmul.f32 %v798, 0.35355338
        %v807 = vld [vmem:[%s3] sm:$0xf]
        %v808 = vld [vmem:[%s3 + $0x4] sm:$0xf]
        %v809 = vld [vmem:[%s3 + $0x8] sm:$0xf]
        %v810 = vld [vmem:[%s3 + $0xc] sm:$0xf]
        %v811 = vld [vmem:[%s3 + $0x10] sm:$0xf]
        %v812 = vld [vmem:[%s3 + $0x14] sm:$0xf]
        %v813 = vld [vmem:[%s3 + $0x18] sm:$0xf]
        %v814 = vld [vmem:[%s3 + $0x1c] sm:$0xf]
        %v815 = vld [vmem:[%s3 + $0x20] sm:$0xf]
        %v816 = vld [vmem:[%s3 + $0x24] sm:$0xf]
        %v817 = vld [vmem:[%s3 + $0x28] sm:$0xf]
        %v818 = vld [vmem:[%s3 + $0x2c] sm:$0xf]
        %v819 = vld [vmem:[%s3 + $0x30] sm:$0xf]
        %v820 = vld [vmem:[%s3 + $0x34] sm:$0xf]
        %v821 = vld [vmem:[%s3 + $0x38] sm:$0xf]
        %v822 = vld [vmem:[%s3 + $0x3c] sm:$0xf]
        %v823 = vld [vmem:[%s4] sm:$0x1]
        %v824 = vld [vmem:[%s4 + $0x1] sm:$0x1]
        %v825 = vld [vmem:[%s4 + $0x2] sm:$0x1]
        %v826 = vld [vmem:[%s4 + $0x3] sm:$0x1]
        %v831 = vlaneseq
        %v832 = vshrl.u32 %v831, 7
        %v833 = vsub.s32 0, %v832
        %v834 = vrot.slane %v823, %v833
        %v835 = vlaneseq
        %v836 = vshrl.u32 %v835, 7
        %v837 = vsub.s32 0, %v836
        %v838 = vrot.slane %v824, %v837
        %v839 = vlaneseq
        %v840 = vshrl.u32 %v839, 7
        %v841 = vsub.s32 0, %v840
        %v842 = vrot.slane %v825, %v841
        %v843 = vlaneseq
        %v844 = vshrl.u32 %v843, 7
        %v845 = vsub.s32 0, %v844
        %v846 = vrot.slane %v826, %v845
        %v855 = vunpack.c.l.b16 %v807
        %v856 = vunpack.c.l.b16 %v808
        %v857 = vunpack.c.l.b16 %v809
        %v858 = vunpack.c.l.b16 %v810
        %v859 = vpack.c.b16 %v856, %v855
        %v860 = vpack.c.b16 %v858, %v857
        %863 = vmatprep.subr.bf16.mxu0 0
        %864 = vmatpush1.bf16.msra.mxu0 %v859
        %865 = vmatprep.subr.bf16.mxu0 0
        %866 = vmatpush1.bf16.msra.mxu0 %v860
        %867 = vmatprep.subr.bf16.mxu0 0
        %868 = vmatpush1.bf16.msra.mxu0 0
        %869 = vmatprep.subr.bf16.mxu0 0
        %870 = vmatpush1.bf16.msra.mxu0 0
        %871 = vmatprep.subr.bf16.mxu0 0
        %872 = vmatpush1.bf16.msra.mxu0 0
        %873 = vmatprep.subr.bf16.mxu0 0
        %874 = vmatpush1.bf16.msra.mxu0 0
        %875 = vmatprep.subr.bf16.mxu0 0
        %876 = vmatpush1.bf16.msra.mxu0 0
        %877 = vmatprep.subr.bf16.mxu0 0
        %878 = vmatpush1.bf16.msra.mxu0 0
        %879 = vmatprep.subr.bf16.mxu0 0
        %880 = vmatpush1.bf16.msra.mxu0 0
        %881 = vmatprep.subr.bf16.mxu0 0
        %882 = vmatpush1.bf16.msra.mxu0 0
        %883 = vmatprep.subr.bf16.mxu0 0
        %884 = vmatpush1.bf16.msra.mxu0 0
        %885 = vmatprep.subr.bf16.mxu0 0
        %886 = vmatpush1.bf16.msra.mxu0 0
        %887 = vmatprep.subr.bf16.mxu0 0
        %888 = vmatpush1.bf16.msra.mxu0 0
        %889 = vmatprep.subr.bf16.mxu0 0
        %890 = vmatpush1.bf16.msra.mxu0 0
        %891 = vmatprep.subr.bf16.mxu0 0
        %892 = vmatpush1.bf16.msra.mxu0 0
        %893 = vmatprep.subr.bf16.mxu0 0
        %894 = vmatpush1.bf16.msra.mxu0 0
        %895 = vmatprep.mubr.bf16.mxu0 0
        %896 = vmatmul.mubr.bf16.gmra.mrb[0].mxu0 %v605
        %v897 = vpop.f32.mrb[0].mxu0
        %v898 = vadd.f32 %v834, %v897
        %v899 = vpop.f32.mrb[0].mxu0
        %v900 = vpop.f32.mrb[0].mxu0
        %v901 = vpop.f32.mrb[0].mxu0
        %902 = vdwg.mxu0
        %v907 = vunpack.c.l.b16 %v811
        %v908 = vunpack.c.l.b16 %v812
        %v909 = vunpack.c.l.b16 %v813
        %v910 = vunpack.c.l.b16 %v814
        %v911 = vpack.c.b16 %v908, %v907
        %v912 = vpack.c.b16 %v910, %v909
        %915 = vmatprep.subr.bf16.mxu0 0
        %916 = vmatpush1.bf16.msra.mxu0 %v911
        %917 = vmatprep.subr.bf16.mxu0 0
        %918 = vmatpush1.bf16.msra.mxu0 %v912
        %919 = vmatprep.subr.bf16.mxu0 0
        %920 = vmatpush1.bf16.msra.mxu0 0
        %921 = vmatprep.subr.bf16.mxu0 0
        %922 = vmatpush1.bf16.msra.mxu0 0
        %923 = vmatprep.subr.bf16.mxu0 0
        %924 = vmatpush1.bf16.msra.mxu0 0
        %925 = vmatprep.subr.bf16.mxu0 0
        %926 = vmatpush1.bf16.msra.mxu0 0
        %927 = vmatprep.subr.bf16.mxu0 0
        %928 = vmatpush1.bf16.msra.mxu0 0
        %929 = vmatprep.subr.bf16.mxu0 0
        %930 = vmatpush1.bf16.msra.mxu0 0
        %931 = vmatprep.subr.bf16.mxu0 0
        %932 = vmatpush1.bf16.msra.mxu0 0
        %933 = vmatprep.subr.bf16.mxu0 0
        %934 = vmatpush1.bf16.msra.mxu0 0
        %935 = vmatprep.subr.bf16.mxu0 0
        %936 = vmatpush1.bf16.msra.mxu0 0
        %937 = vmatprep.subr.bf16.mxu0 0
        %938 = vmatpush1.bf16.msra.mxu0 0
        %939 = vmatprep.subr.bf16.mxu0 0
        %940 = vmatpush1.bf16.msra.mxu0 0
        %941 = vmatprep.subr.bf16.mxu0 0
        %942 = vmatpush1.bf16.msra.mxu0 0
        %943 = vmatprep.subr.bf16.mxu0 0
        %944 = vmatpush1.bf16.msra.mxu0 0
        %945 = vmatprep.subr.bf16.mxu0 0
        %946 = vmatpush1.bf16.msra.mxu0 0
        %947 = vmatprep.mubr.bf16.mxu0 0
        %948 = vmatmul.mubr.bf16.gmra.mrb[0].mxu0 %v605
        %v949 = vpop.f32.mrb[0].mxu0
        %v950 = vadd.f32 %v838, %v949
        %v951 = vpop.f32.mrb[0].mxu0
        %v952 = vpop.f32.mrb[0].mxu0
        %v953 = vpop.f32.mrb[0].mxu0
        %954 = vdwg.mxu0
        %v959 = vunpack.c.l.b16 %v815
        %v960 = vunpack.c.l.b16 %v816
        %v961 = vunpack.c.l.b16 %v817
        %v962 = vunpack.c.l.b16 %v818
        %v963 = vpack.c.b16 %v960, %v959
        %v964 = vpack.c.b16 %v962, %v961
        %967 = vmatprep.subr.bf16.mxu0 0
        %968 = vmatpush1.bf16.msra.mxu0 %v963
        %969 = vmatprep.subr.bf16.mxu0 0
        %970 = vmatpush1.bf16.msra.mxu0 %v964
        %971 = vmatprep.subr.bf16.mxu0 0
        %972 = vmatpush1.bf16.msra.mxu0 0
        %973 = vmatprep.subr.bf16.mxu0 0
        %974 = vmatpush1.bf16.msra.mxu0 0
        %975 = vmatprep.subr.bf16.mxu0 0
        %976 = vmatpush1.bf16.msra.mxu0 0
        %977 = vmatprep.subr.bf16.mxu0 0
        %978 = vmatpush1.bf16.msra.mxu0 0
        %979 = vmatprep.subr.bf16.mxu0 0
        %980 = vmatpush1.bf16.msra.mxu0 0
        %981 = vmatprep.subr.bf16.mxu0 0
        %982 = vmatpush1.bf16.msra.mxu0 0
        %983 = vmatprep.subr.bf16.mxu0 0
        %984 = vmatpush1.bf16.msra.mxu0 0
        %985 = vmatprep.subr.bf16.mxu0 0
        %986 = vmatpush1.bf16.msra.mxu0 0
        %987 = vmatprep.subr.bf16.mxu0 0
        %988 = vmatpush1.bf16.msra.mxu0 0
        %989 = vmatprep.subr.bf16.mxu0 0
        %990 = vmatpush1.bf16.msra.mxu0 0
        %991 = vmatprep.subr.bf16.mxu0 0
        %992 = vmatpush1.bf16.msra.mxu0 0
        %993 = vmatprep.subr.bf16.mxu0 0
        %994 = vmatpush1.bf16.msra.mxu0 0
        %995 = vmatprep.subr.bf16.mxu0 0
        %996 = vmatpush1.bf16.msra.mxu0 0
        %997 = vmatprep.subr.bf16.mxu0 0
        %998 = vmatpush1.bf16.msra.mxu0 0
        %999 = vmatprep.mubr.bf16.mxu0 0
        %1000 = vmatmul.mubr.bf16.gmra.mrb[0].mxu0 %v605
        %v1001 = vpop.f32.mrb[0].mxu0
        %v1002 = vadd.f32 %v842, %v1001
        %v1003 = vpop.f32.mrb[0].mxu0
        %v1004 = vpop.f32.mrb[0].mxu0
        %v1005 = vpop.f32.mrb[0].mxu0
        %1006 = vdwg.mxu0
        %v1011 = vunpack.c.l.b16 %v819
        %v1012 = vunpack.c.l.b16 %v820
        %v1013 = vunpack.c.l.b16 %v821
        %v1014 = vunpack.c.l.b16 %v822
        %v1015 = vpack.c.b16 %v1012, %v1011
        %v1016 = vpack.c.b16 %v1014, %v1013
        %1019 = vmatprep.subr.bf16.mxu0 0
        %1020 = vmatpush1.bf16.msra.mxu0 %v1015
        %1021 = vmatprep.subr.bf16.mxu0 0
        %1022 = vmatpush1.bf16.msra.mxu0 %v1016
        %1023 = vmatprep.subr.bf16.mxu0 0
        %1024 = vmatpush1.bf16.msra.mxu0 0
        %1025 = vmatprep.subr.bf16.mxu0 0
        %1026 = vmatpush1.bf16.msra.mxu0 0
        %1027 = vmatprep.subr.bf16.mxu0 0
        %1028 = vmatpush1.bf16.msra.mxu0 0
        %1029 = vmatprep.subr.bf16.mxu0 0
        %1030 = vmatpush1.bf16.msra.mxu0 0
        %1031 = vmatprep.subr.bf16.mxu0 0
        %1032 = vmatpush1.bf16.msra.mxu0 0
        %1033 = vmatprep.subr.bf16.mxu0 0
        %1034 = vmatpush1.bf16.msra.mxu0 0
        %1035 = vmatprep.subr.bf16.mxu0 0
        %1036 = vmatpush1.bf16.msra.mxu0 0
        %1037 = vmatprep.subr.bf16.mxu0 0
        %1038 = vmatpush1.bf16.msra.mxu0 0
        %1039 = vmatprep.subr.bf16.mxu0 0
        %1040 = vmatpush1.bf16.msra.mxu0 0
        %1041 = vmatprep.subr.bf16.mxu0 0
        %1042 = vmatpush1.bf16.msra.mxu0 0
        %1043 = vmatprep.subr.bf16.mxu0 0
        %1044 = vmatpush1.bf16.msra.mxu0 0
        %1045 = vmatprep.subr.bf16.mxu0 0
        %1046 = vmatpush1.bf16.msra.mxu0 0
        %1047 = vmatprep.subr.bf16.mxu0 0
        %1048 = vmatpush1.bf16.msra.mxu0 0
        %1049 = vmatprep.subr.bf16.mxu0 0
        %1050 = vmatpush1.bf16.msra.mxu0 0
        %1051 = vmatprep.mubr.bf16.mxu0 0
        %1052 = vmatmul.mubr.bf16.gmra.mrb[0].mxu0 %v605
        %v1053 = vpop.f32.mrb[0].mxu0
        %v1054 = vadd.f32 %v846, %v1053
        %v1055 = vpop.f32.mrb[0].mxu0
        %v1056 = vpop.f32.mrb[0].mxu0
        %v1057 = vpop.f32.mrb[0].mxu0
        %1058 = vdwg.mxu0
        %v1059 = vld [vmem:[%s5] sm:$0xf]
        %v1060 = vld [vmem:[%s5 + $0x4] sm:$0xf]
        %v1061 = vld [vmem:[%s5 + $0x8] sm:$0xf]
        %v1062 = vld [vmem:[%s5 + $0xc] sm:$0xf]
        %v1063 = vld [vmem:[%s5 + $0x10] sm:$0xf]
        %v1064 = vld [vmem:[%s5 + $0x14] sm:$0xf]
        %v1065 = vld [vmem:[%s5 + $0x18] sm:$0xf]
        %v1066 = vld [vmem:[%s5 + $0x1c] sm:$0xf]
        %v1067 = vld [vmem:[%s5 + $0x20] sm:$0xf]
        %v1068 = vld [vmem:[%s5 + $0x24] sm:$0xf]
        %v1069 = vld [vmem:[%s5 + $0x28] sm:$0xf]
        %v1070 = vld [vmem:[%s5 + $0x2c] sm:$0xf]
        %v1071 = vld [vmem:[%s5 + $0x30] sm:$0xf]
        %v1072 = vld [vmem:[%s5 + $0x34] sm:$0xf]
        %v1073 = vld [vmem:[%s5 + $0x38] sm:$0xf]
        %v1074 = vld [vmem:[%s5 + $0x3c] sm:$0xf]
        %v1075 = vld [vmem:[%s6] sm:$0x1]
        %v1076 = vld [vmem:[%s6 + $0x1] sm:$0x1]
        %v1077 = vld [vmem:[%s6 + $0x2] sm:$0x1]
        %v1078 = vld [vmem:[%s6 + $0x3] sm:$0x1]
        %v1083 = vlaneseq
        %v1084 = vshrl.u32 %v1083, 7
        %v1085 = vsub.s32 0, %v1084
        %v1086 = vrot.slane %v1075, %v1085
        %v1087 = vlaneseq
        %v1088 = vshrl.u32 %v1087, 7
        %v1089 = vsub.s32 0, %v1088
        %v1090 = vrot.slane %v1076, %v1089
        %v1091 = vlaneseq
        %v1092 = vshrl.u32 %v1091, 7
        %v1093 = vsub.s32 0, %v1092
        %v1094 = vrot.slane %v1077, %v1093
        %v1095 = vlaneseq
        %v1096 = vshrl.u32 %v1095, 7
        %v1097 = vsub.s32 0, %v1096
        %v1098 = vrot.slane %v1078, %v1097
        %v1107 = vunpack.c.l.b16 %v1059
        %v1108 = vunpack.c.l.b16 %v1060
        %v1109 = vunpack.c.l.b16 %v1061
        %v1110 = vunpack.c.l.b16 %v1062
        %v1111 = vpack.c.b16 %v1108, %v1107
        %v1112 = vpack.c.b16 %v1110, %v1109
        %1115 = vmatprep.subr.bf16.mxu0 0
        %1116 = vmatpush1.bf16.msra.mxu0 %v1111
        %1117 = vmatprep.subr.bf16.mxu0 0
        %1118 = vmatpush1.bf16.msra.mxu0 %v1112
        %1119 = vmatprep.subr.bf16.mxu0 0
        %1120 = vmatpush1.bf16.msra.mxu0 0
        %1121 = vmatprep.subr.bf16.mxu0 0
        %1122 = vmatpush1.bf16.msra.mxu0 0
        %1123 = vmatprep.subr.bf16.mxu0 0
        %1124 = vmatpush1.bf16.msra.mxu0 0
        %1125 = vmatprep.subr.bf16.mxu0 0
        %1126 = vmatpush1.bf16.msra.mxu0 0
        %1127 = vmatprep.subr.bf16.mxu0 0
        %1128 = vmatpush1.bf16.msra.mxu0 0
        %1129 = vmatprep.subr.bf16.mxu0 0
        %1130 = vmatpush1.bf16.msra.mxu0 0
        %1131 = vmatprep.subr.bf16.mxu0 0
        %1132 = vmatpush1.bf16.msra.mxu0 0
        %1133 = vmatprep.subr.bf16.mxu0 0
        %1134 = vmatpush1.bf16.msra.mxu0 0
        %1135 = vmatprep.subr.bf16.mxu0 0
        %1136 = vmatpush1.bf16.msra.mxu0 0
        %1137 = vmatprep.subr.bf16.mxu0 0
        %1138 = vmatpush1.bf16.msra.mxu0 0
        %1139 = vmatprep.subr.bf16.mxu0 0
        %1140 = vmatpush1.bf16.msra.mxu0 0
        %1141 = vmatprep.subr.bf16.mxu0 0
        %1142 = vmatpush1.bf16.msra.mxu0 0
        %1143 = vmatprep.subr.bf16.mxu0 0
        %1144 = vmatpush1.bf16.msra.mxu0 0
        %1145 = vmatprep.subr.bf16.mxu0 0
        %1146 = vmatpush1.bf16.msra.mxu0 0
        %1147 = vmatprep.mubr.bf16.mxu0 0
        %1148 = vmatmul.mubr.bf16.gmra.mrb[0].mxu0 %v605
        %v1149 = vpop.f32.mrb[0].mxu0
        %v1150 = vadd.f32 %v1086, %v1149
        %v1151 = vpop.f32.mrb[0].mxu0
        %v1152 = vpop.f32.mrb[0].mxu0
        %v1153 = vpop.f32.mrb[0].mxu0
        %1154 = vdwg.mxu0
        %v1159 = vunpack.c.l.b16 %v1063
        %v1160 = vunpack.c.l.b16 %v1064
        %v1161 = vunpack.c.l.b16 %v1065
        %v1162 = vunpack.c.l.b16 %v1066
        %v1163 = vpack.c.b16 %v1160, %v1159
        %v1164 = vpack.c.b16 %v1162, %v1161
        %1167 = vmatprep.subr.bf16.mxu0 0
        %1168 = vmatpush1.bf16.msra.mxu0 %v1163
        %1169 = vmatprep.subr.bf16.mxu0 0
        %1170 = vmatpush1.bf16.msra.mxu0 %v1164
        %1171 = vmatprep.subr.bf16.mxu0 0
        %1172 = vmatpush1.bf16.msra.mxu0 0
        %1173 = vmatprep.subr.bf16.mxu0 0
        %1174 = vmatpush1.bf16.msra.mxu0 0
        %1175 = vmatprep.subr.bf16.mxu0 0
        %1176 = vmatpush1.bf16.msra.mxu0 0
        %1177 = vmatprep.subr.bf16.mxu0 0
        %1178 = vmatpush1.bf16.msra.mxu0 0
        %1179 = vmatprep.subr.bf16.mxu0 0
        %1180 = vmatpush1.bf16.msra.mxu0 0
        %1181 = vmatprep.subr.bf16.mxu0 0
        %1182 = vmatpush1.bf16.msra.mxu0 0
        %1183 = vmatprep.subr.bf16.mxu0 0
        %1184 = vmatpush1.bf16.msra.mxu0 0
        %1185 = vmatprep.subr.bf16.mxu0 0
        %1186 = vmatpush1.bf16.msra.mxu0 0
        %1187 = vmatprep.subr.bf16.mxu0 0
        %1188 = vmatpush1.bf16.msra.mxu0 0
        %1189 = vmatprep.subr.bf16.mxu0 0
        %1190 = vmatpush1.bf16.msra.mxu0 0
        %1191 = vmatprep.subr.bf16.mxu0 0
        %1192 = vmatpush1.bf16.msra.mxu0 0
        %1193 = vmatprep.subr.bf16.mxu0 0
        %1194 = vmatpush1.bf16.msra.mxu0 0
        %1195 = vmatprep.subr.bf16.mxu0 0
        %1196 = vmatpush1.bf16.msra.mxu0 0
        %1197 = vmatprep.subr.bf16.mxu0 0
        %1198 = vmatpush1.bf16.msra.mxu0 0
        %1199 = vmatprep.mubr.bf16.mxu0 0
        %1200 = vmatmul.mubr.bf16.gmra.mrb[0].mxu0 %v605
        %v1201 = vpop.f32.mrb[0].mxu0
        %v1202 = vadd.f32 %v1090, %v1201
        %v1203 = vpop.f32.mrb[0].mxu0
        %v1204 = vpop.f32.mrb[0].mxu0
        %v1205 = vpop.f32.mrb[0].mxu0
        %1206 = vdwg.mxu0
        %v1211 = vunpack.c.l.b16 %v1067
        %v1212 = vunpack.c.l.b16 %v1068
        %v1213 = vunpack.c.l.b16 %v1069
        %v1214 = vunpack.c.l.b16 %v1070
        %v1215 = vpack.c.b16 %v1212, %v1211
        %v1216 = vpack.c.b16 %v1214, %v1213
        %1219 = vmatprep.subr.bf16.mxu0 0
        %1220 = vmatpush1.bf16.msra.mxu0 %v1215
        %1221 = vmatprep.subr.bf16.mxu0 0
        %1222 = vmatpush1.bf16.msra.mxu0 %v1216
        %1223 = vmatprep.subr.bf16.mxu0 0
        %1224 = vmatpush1.bf16.msra.mxu0 0
        %1225 = vmatprep.subr.bf16.mxu0 0
        %1226 = vmatpush1.bf16.msra.mxu0 0
        %1227 = vmatprep.subr.bf16.mxu0 0
        %1228 = vmatpush1.bf16.msra.mxu0 0
        %1229 = vmatprep.subr.bf16.mxu0 0
        %1230 = vmatpush1.bf16.msra.mxu0 0
        %1231 = vmatprep.subr.bf16.mxu0 0
        %1232 = vmatpush1.bf16.msra.mxu0 0
        %1233 = vmatprep.subr.bf16.mxu0 0
        %1234 = vmatpush1.bf16.msra.mxu0 0
        %1235 = vmatprep.subr.bf16.mxu0 0
        %1236 = vmatpush1.bf16.msra.mxu0 0
        %1237 = vmatprep.subr.bf16.mxu0 0
        %1238 = vmatpush1.bf16.msra.mxu0 0
        %1239 = vmatprep.subr.bf16.mxu0 0
        %1240 = vmatpush1.bf16.msra.mxu0 0
        %1241 = vmatprep.subr.bf16.mxu0 0
        %1242 = vmatpush1.bf16.msra.mxu0 0
        %1243 = vmatprep.subr.bf16.mxu0 0
        %1244 = vmatpush1.bf16.msra.mxu0 0
        %1245 = vmatprep.subr.bf16.mxu0 0
        %1246 = vmatpush1.bf16.msra.mxu0 0
        %1247 = vmatprep.subr.bf16.mxu0 0
        %1248 = vmatpush1.bf16.msra.mxu0 0
        %1249 = vmatprep.subr.bf16.mxu0 0
        %1250 = vmatpush1.bf16.msra.mxu0 0
        %1251 = vmatprep.mubr.bf16.mxu0 0
        %1252 = vmatmul.mubr.bf16.gmra.mrb[0].mxu0 %v605
        %v1253 = vpop.f32.mrb[0].mxu0
        %v1254 = vadd.f32 %v1094, %v1253
        %v1255 = vpop.f32.mrb[0].mxu0
        %v1256 = vpop.f32.mrb[0].mxu0
        %v1257 = vpop.f32.mrb[0].mxu0
        %1258 = vdwg.mxu0
        %v1263 = vunpack.c.l.b16 %v1071
        %v1264 = vunpack.c.l.b16 %v1072
        %v1265 = vunpack.c.l.b16 %v1073
        %v1266 = vunpack.c.l.b16 %v1074
        %v1267 = vpack.c.b16 %v1264, %v1263
        %v1268 = vpack.c.b16 %v1266, %v1265
        %1271 = vmatprep.subr.bf16.mxu0 0
        %1272 = vmatpush1.bf16.msra.mxu0 %v1267
        %1273 = vmatprep.subr.bf16.mxu0 0
        %1274 = vmatpush1.bf16.msra.mxu0 %v1268
        %1275 = vmatprep.subr.bf16.mxu0 0
        %1276 = vmatpush1.bf16.msra.mxu0 0
        %1277 = vmatprep.subr.bf16.mxu0 0
        %1278 = vmatpush1.bf16.msra.mxu0 0
        %1279 = vmatprep.subr.bf16.mxu0 0
        %1280 = vmatpush1.bf16.msra.mxu0 0
        %1281 = vmatprep.subr.bf16.mxu0 0
        %1282 = vmatpush1.bf16.msra.mxu0 0
        %1283 = vmatprep.subr.bf16.mxu0 0
        %1284 = vmatpush1.bf16.msra.mxu0 0
        %1285 = vmatprep.subr.bf16.mxu0 0
        %1286 = vmatpush1.bf16.msra.mxu0 0
        %1287 = vmatprep.subr.bf16.mxu0 0
        %1288 = vmatpush1.bf16.msra.mxu0 0
        %1289 = vmatprep.subr.bf16.mxu0 0
        %1290 = vmatpush1.bf16.msra.mxu0 0
        %1291 = vmatprep.subr.bf16.mxu0 0
        %1292 = vmatpush1.bf16.msra.mxu0 0
        %1293 = vmatprep.subr.bf16.mxu0 0
        %1294 = vmatpush1.bf16.msra.mxu0 0
        %1295 = vmatprep.subr.bf16.mxu0 0
        %1296 = vmatpush1.bf16.msra.mxu0 0
        %1297 = vmatprep.subr.bf16.mxu0 0
        %1298 = vmatpush1.bf16.msra.mxu0 0
        %1299 = vmatprep.subr.bf16.mxu0 0
        %1300 = vmatpush1.bf16.msra.mxu0 0
        %1301 = vmatprep.subr.bf16.mxu0 0
        %1302 = vmatpush1.bf16.msra.mxu0 0
        %1303 = vmatprep.mubr.bf16.mxu0 0
        %1304 = vmatmul.mubr.bf16.gmra.mrb[0].mxu0 %v605
        %v1305 = vpop.f32.mrb[0].mxu0
        %v1306 = vadd.f32 %v1098, %v1305
        %v1307 = vpop.f32.mrb[0].mxu0
        %v1308 = vpop.f32.mrb[0].mxu0
        %v1309 = vpop.f32.mrb[0].mxu0
        %1310 = vdwg.mxu0
        %v1311 = vpack.c.bf16 %v803, %v803
        %v1312 = vpack.c.bf16 %v804, %v804
        %v1313 = vpack.c.bf16 %v805, %v805
        %v1314 = vpack.c.bf16 %v806, %v806
        %v1315 = vpack.c.bf16 %v898, %v898
        %v1316 = vpack.c.bf16 %v950, %v950
        %v1317 = vpack.c.bf16 %v1002, %v1002
        %v1318 = vpack.c.bf16 %v1054, %v1054
        %vm1319 = vcmask 64512
        %v1321 = vsel %vm1319, %v1311, 0
        %v1324 = vsel %vm1319, %v1315, 0
        %1326 = vmatprep.subr.bf16.mxu0 0
        %1327 = vmatpush1.bf16.xpose.msra.mxu0 %v1324
        %1328 = vmatprep.subr.bf16.mxu0 0
        %1329 = vmatpush1.bf16.xpose.msra.mxu0 0
        %1330 = vmatprep.subr.bf16.mxu0 0
        %1331 = vmatpush1.bf16.xpose.msra.mxu0 0
        %1332 = vmatprep.subr.bf16.mxu0 0
        %1333 = vmatpush1.bf16.xpose.msra.mxu0 0
        %1334 = vmatprep.subr.bf16.mxu0 0
        %1335 = vmatpush1.bf16.xpose.msra.mxu0 0
        %1336 = vmatprep.subr.bf16.mxu0 0
        %1337 = vmatpush1.bf16.xpose.msra.mxu0 0
        %1338 = vmatprep.subr.bf16.mxu0 0
        %1339 = vmatpush1.bf16.xpose.msra.mxu0 0
        %1340 = vmatprep.subr.bf16.mxu0 0
        %1341 = vmatpush1.bf16.xpose.msra.mxu0 0
        %1342 = vmatprep.subr.bf16.mxu0 0
        %1343 = vmatpush1.bf16.xpose.msra.mxu0 0
        %1344 = vmatprep.subr.bf16.mxu0 0
        %1345 = vmatpush1.bf16.xpose.msra.mxu0 0
        %1346 = vmatprep.subr.bf16.mxu0 0
        %1347 = vmatpush1.bf16.xpose.msra.mxu0 0
        %1348 = vmatprep.subr.bf16.mxu0 0
        %1349 = vmatpush1.bf16.xpose.msra.mxu0 0
        %1350 = vmatprep.subr.bf16.mxu0 0
        %1351 = vmatpush1.bf16.xpose.msra.mxu0 0
        %1352 = vmatprep.subr.bf16.mxu0 0
        %1353 = vmatpush1.bf16.xpose.msra.mxu0 0
        %1354 = vmatprep.subr.bf16.mxu0 0
        %1355 = vmatpush1.bf16.xpose.msra.mxu0 0
        %1356 = vmatprep.subr.bf16.mxu0 0
        %1357 = vmatpush1.bf16.xpose.msra.mxu0 0
        %1358 = vmatprep.mubr.bf16.mxu0 0
        %1359 = vmatmul.mubr.bf16.gmra.mrb[0].mxu0 %v1321
        %v1360 = vpop.f32.mrb[0].mxu0
        %v1361 = vadd.f32 0.0, %v1360
        %v1362 = vpop.f32.mrb[0].mxu0
        %v1363 = vpop.f32.mrb[0].mxu0
        %v1364 = vpop.f32.mrb[0].mxu0
        %1365 = vdwg.mxu0
        %v1367 = vsel %vm1319, %v1312, 0
        %v1370 = vsel %vm1319, %v1316, 0
        %1372 = vmatprep.subr.bf16.mxu0 0
        %1373 = vmatpush1.bf16.xpose.msra.mxu0 %v1370
        %1374 = vmatprep.subr.bf16.mxu0 0
        %1375 = vmatpush1.bf16.xpose.msra.mxu0 0
        %1376 = vmatprep.subr.bf16.mxu0 0
        %1377 = vmatpush1.bf16.xpose.msra.mxu0 0
        %1378 = vmatprep.subr.bf16.mxu0 0
        %1379 = vmatpush1.bf16.xpose.msra.mxu0 0
        %1380 = vmatprep.subr.bf16.mxu0 0
        %1381 = vmatpush1.bf16.xpose.msra.mxu0 0
        %1382 = vmatprep.subr.bf16.mxu0 0
        %1383 = vmatpush1.bf16.xpose.msra.mxu0 0
        %1384 = vmatprep.subr.bf16.mxu0 0
        %1385 = vmatpush1.bf16.xpose.msra.mxu0 0
        %1386 = vmatprep.subr.bf16.mxu0 0
        %1387 = vmatpush1.bf16.xpose.msra.mxu0 0
        %1388 = vmatprep.subr.bf16.mxu0 0
        %1389 = vmatpush1.bf16.xpose.msra.mxu0 0
        %1390 = vmatprep.subr.bf16.mxu0 0
        %1391 = vmatpush1.bf16.xpose.msra.mxu0 0
        %1392 = vmatprep.subr.bf16.mxu0 0
        %1393 = vmatpush1.bf16.xpose.msra.mxu0 0
        %1394 = vmatprep.subr.bf16.mxu0 0
        %1395 = vmatpush1.bf16.xpose.msra.mxu0 0
        %1396 = vmatprep.subr.bf16.mxu0 0
        %1397 = vmatpush1.bf16.xpose.msra.mxu0 0
        %1398 = vmatprep.subr.bf16.mxu0 0
        %1399 = vmatpush1.bf16.xpose.msra.mxu0 0
        %1400 = vmatprep.subr.bf16.mxu0 0
        %1401 = vmatpush1.bf16.xpose.msra.mxu0 0
        %1402 = vmatprep.subr.bf16.mxu0 0
        %1403 = vmatpush1.bf16.xpose.msra.mxu0 0
        %1404 = vmatprep.mubr.bf16.mxu0 0
        %1405 = vmatmul.mubr.bf16.gmra.mrb[0].mxu0 %v1367
        %v1406 = vpop.f32.mrb[0].mxu0
        %v1407 = vadd.f32 0.0, %v1406
        %v1408 = vpop.f32.mrb[0].mxu0
        %v1409 = vpop.f32.mrb[0].mxu0
        %v1410 = vpop.f32.mrb[0].mxu0
        %1411 = vdwg.mxu0
        %v1413 = vsel %vm1319, %v1313, 0
        %v1416 = vsel %vm1319, %v1317, 0
        %1418 = vmatprep.subr.bf16.mxu0 0
        %1419 = vmatpush1.bf16.xpose.msra.mxu0 %v1416
        %1420 = vmatprep.subr.bf16.mxu0 0
        %1421 = vmatpush1.bf16.xpose.msra.mxu0 0
        %1422 = vmatprep.subr.bf16.mxu0 0
        %1423 = vmatpush1.bf16.xpose.msra.mxu0 0
        %1424 = vmatprep.subr.bf16.mxu0 0
        %1425 = vmatpush1.bf16.xpose.msra.mxu0 0
        %1426 = vmatprep.subr.bf16.mxu0 0
        %1427 = vmatpush1.bf16.xpose.msra.mxu0 0
        %1428 = vmatprep.subr.bf16.mxu0 0
        %1429 = vmatpush1.bf16.xpose.msra.mxu0 0
        %1430 = vmatprep.subr.bf16.mxu0 0
        %1431 = vmatpush1.bf16.xpose.msra.mxu0 0
        %1432 = vmatprep.subr.bf16.mxu0 0
        %1433 = vmatpush1.bf16.xpose.msra.mxu0 0
        %1434 = vmatprep.subr.bf16.mxu0 0
        %1435 = vmatpush1.bf16.xpose.msra.mxu0 0
        %1436 = vmatprep.subr.bf16.mxu0 0
        %1437 = vmatpush1.bf16.xpose.msra.mxu0 0
        %1438 = vmatprep.subr.bf16.mxu0 0
        %1439 = vmatpush1.bf16.xpose.msra.mxu0 0
        %1440 = vmatprep.subr.bf16.mxu0 0
        %1441 = vmatpush1.bf16.xpose.msra.mxu0 0
        %1442 = vmatprep.subr.bf16.mxu0 0
        %1443 = vmatpush1.bf16.xpose.msra.mxu0 0
        %1444 = vmatprep.subr.bf16.mxu0 0
        %1445 = vmatpush1.bf16.xpose.msra.mxu0 0
        %1446 = vmatprep.subr.bf16.mxu0 0
        %1447 = vmatpush1.bf16.xpose.msra.mxu0 0
        %1448 = vmatprep.subr.bf16.mxu0 0
        %1449 = vmatpush1.bf16.xpose.msra.mxu0 0
        %1450 = vmatprep.mubr.bf16.mxu0 0
        %1451 = vmatmul.mubr.bf16.gmra.mrb[0].mxu0 %v1413
        %v1452 = vpop.f32.mrb[0].mxu0
        %v1453 = vadd.f32 0.0, %v1452
        %v1454 = vpop.f32.mrb[0].mxu0
        %v1455 = vpop.f32.mrb[0].mxu0
        %v1456 = vpop.f32.mrb[0].mxu0
        %1457 = vdwg.mxu0
        %v1459 = vsel %vm1319, %v1314, 0
        %v1462 = vsel %vm1319, %v1318, 0
        %1464 = vmatprep.subr.bf16.mxu0 0
        %1465 = vmatpush1.bf16.xpose.msra.mxu0 %v1462
        %1466 = vmatprep.subr.bf16.mxu0 0
        %1467 = vmatpush1.bf16.xpose.msra.mxu0 0
        %1468 = vmatprep.subr.bf16.mxu0 0
        %1469 = vmatpush1.bf16.xpose.msra.mxu0 0
        %1470 = vmatprep.subr.bf16.mxu0 0
        %1471 = vmatpush1.bf16.xpose.msra.mxu0 0
        %1472 = vmatprep.subr.bf16.mxu0 0
        %1473 = vmatpush1.bf16.xpose.msra.mxu0 0
        %1474 = vmatprep.subr.bf16.mxu0 0
        %1475 = vmatpush1.bf16.xpose.msra.mxu0 0
        %1476 = vmatprep.subr.bf16.mxu0 0
        %1477 = vmatpush1.bf16.xpose.msra.mxu0 0
        %1478 = vmatprep.subr.bf16.mxu0 0
        %1479 = vmatpush1.bf16.xpose.msra.mxu0 0
        %1480 = vmatprep.subr.bf16.mxu0 0
        %1481 = vmatpush1.bf16.xpose.msra.mxu0 0
        %1482 = vmatprep.subr.bf16.mxu0 0
        %1483 = vmatpush1.bf16.xpose.msra.mxu0 0
        %1484 = vmatprep.subr.bf16.mxu0 0
        %1485 = vmatpush1.bf16.xpose.msra.mxu0 0
        %1486 = vmatprep.subr.bf16.mxu0 0
        %1487 = vmatpush1.bf16.xpose.msra.mxu0 0
        %1488 = vmatprep.subr.bf16.mxu0 0
        %1489 = vmatpush1.bf16.xpose.msra.mxu0 0
        %1490 = vmatprep.subr.bf16.mxu0 0
        %1491 = vmatpush1.bf16.xpose.msra.mxu0 0
        %1492 = vmatprep.subr.bf16.mxu0 0
        %1493 = vmatpush1.bf16.xpose.msra.mxu0 0
        %1494 = vmatprep.subr.bf16.mxu0 0
        %1495 = vmatpush1.bf16.xpose.msra.mxu0 0
        %1496 = vmatprep.mubr.bf16.mxu0 0
        %1497 = vmatmul.mubr.bf16.gmra.mrb[0].mxu0 %v1459
        %v1498 = vpop.f32.mrb[0].mxu0
        %v1499 = vadd.f32 0.0, %v1498
        %v1500 = vpop.f32.mrb[0].mxu0
        %v1501 = vpop.f32.mrb[0].mxu0
        %v1502 = vpop.f32.mrb[0].mxu0
        %1503 = vdwg.mxu0
        %v1504 = vsel %vm1319, %v1361, -inf
        %1505 = vmax.xlane.f32.xlu0 %v1504
        %v1506 = vpop.xlane.xlu0 %1505
        %v1507 = vsel %vm1319, %v1407, -inf
        %1508 = vmax.xlane.f32.xlu0 %v1507
        %v1509 = vpop.xlane.xlu0 %1508
        %v1510 = vsel %vm1319, %v1453, -inf
        %1511 = vmax.xlane.f32.xlu0 %v1510
        %v1512 = vpop.xlane.xlu0 %1511
        %v1513 = vsel %vm1319, %v1499, -inf
        %1514 = vmax.xlane.f32.xlu0 %v1513
        %v1515 = vpop.xlane.xlu0 %1514
        %v1516 = vsub.f32 %v1361, %v1506
        %v1517 = vsub.f32 %v1407, %v1509
        %v1518 = vsub.f32 %v1453, %v1512
        %v1519 = vsub.f32 %v1499, %v1515
        %v1520 = vmul.f32 %v1516, 1.442695
        %v1521 = vpow.pop %v1520
        %v1522 = vmul.f32 %v1517, 1.442695
        %v1523 = vpow.pop %v1522
        %v1524 = vmul.f32 %v1518, 1.442695
        %v1525 = vpow.pop %v1524
        %v1526 = vmul.f32 %v1519, 1.442695
        %v1527 = vpow.pop %v1526
        %v1528 = vsel %vm1319, %v1521, 0.0
        %1529 = vadd.xlane.f32.xlu0 %v1528
        %v1530 = vpop.xlane.xlu0 %1529
        %v1531 = vsel %vm1319, %v1523, 0.0
        %1532 = vadd.xlane.f32.xlu0 %v1531
        %v1533 = vpop.xlane.xlu0 %1532
        %v1534 = vsel %vm1319, %v1525, 0.0
        %1535 = vadd.xlane.f32.xlu0 %v1534
        %v1536 = vpop.xlane.xlu0 %1535
        %v1537 = vsel %vm1319, %v1527, 0.0
        %1538 = vadd.xlane.f32.xlu0 %v1537
        %v1539 = vpop.xlane.xlu0 %1538
        %v1540 = vrcp.pop %v1530
        %v1541 = vrcp.pop %v1533
        %v1542 = vrcp.pop %v1536
        %v1543 = vrcp.pop %v1539
        %v1544 = vmul.f32 %v1521, %v1540
        %v1545 = vmul.f32 %v1523, %v1541
        %v1546 = vmul.f32 %v1525, %v1542
        %v1547 = vmul.f32 %v1527, %v1543
        %v1548 = vpack.c.bf16 %v1544, %v1544
        %v1549 = vpack.c.bf16 %v1545, %v1545
        %v1550 = vpack.c.bf16 %v1546, %v1546
        %v1551 = vpack.c.bf16 %v1547, %v1547
        %v1552 = vpack.c.bf16 %v1150, %v1150
        %v1553 = vpack.c.bf16 %v1202, %v1202
        %v1554 = vpack.c.bf16 %v1254, %v1254
        %v1555 = vpack.c.bf16 %v1306, %v1306
        %v1557 = vsel %vm1319, %v1548, 0
        %vm1559 = vcmask 1043456
        %v1561 = vsel %vm1559, %v1552, 0
        %1563 = vmatprep.subr.bf16.mxu0 0
        %1564 = vmatpush1.bf16.msra.mxu0 %v1561
        %1565 = vmatprep.subr.bf16.mxu0 0
        %1566 = vmatpush1.bf16.msra.mxu0 0
        %1567 = vmatprep.subr.bf16.mxu0 0
        %1568 = vmatpush1.bf16.msra.mxu0 0
        %1569 = vmatprep.subr.bf16.mxu0 0
        %1570 = vmatpush1.bf16.msra.mxu0 0
        %1571 = vmatprep.subr.bf16.mxu0 0
        %1572 = vmatpush1.bf16.msra.mxu0 0
        %1573 = vmatprep.subr.bf16.mxu0 0
        %1574 = vmatpush1.bf16.msra.mxu0 0
        %1575 = vmatprep.subr.bf16.mxu0 0
        %1576 = vmatpush1.bf16.msra.mxu0 0
        %1577 = vmatprep.subr.bf16.mxu0 0
        %1578 = vmatpush1.bf16.msra.mxu0 0
        %1579 = vmatprep.subr.bf16.mxu0 0
        %1580 = vmatpush1.bf16.msra.mxu0 0
        %1581 = vmatprep.subr.bf16.mxu0 0
        %1582 = vmatpush1.bf16.msra.mxu0 0
        %1583 = vmatprep.subr.bf16.mxu0 0
        %1584 = vmatpush1.bf16.msra.mxu0 0
        %1585 = vmatprep.subr.bf16.mxu0 0
        %1586 = vmatpush1.bf16.msra.mxu0 0
        %1587 = vmatprep.subr.bf16.mxu0 0
        %1588 = vmatpush1.bf16.msra.mxu0 0
        %1589 = vmatprep.subr.bf16.mxu0 0
        %1590 = vmatpush1.bf16.msra.mxu0 0
        %1591 = vmatprep.subr.bf16.mxu0 0
        %1592 = vmatpush1.bf16.msra.mxu0 0
        %1593 = vmatprep.subr.bf16.mxu0 0
        %1594 = vmatpush1.bf16.msra.mxu0 0
        %1595 = vmatprep.mubr.bf16.mxu0 0
        %1596 = vmatmul.mubr.bf16.gmra.mrb[0].mxu0 %v1557
        %v1597 = vpop.f32.mrb[0].mxu0
        %v1598 = vadd.f32 0.0, %v1597
        %v1599 = vpop.f32.mrb[0].mxu0
        %v1600 = vpop.f32.mrb[0].mxu0
        %v1601 = vpop.f32.mrb[0].mxu0
        %1602 = vdwg.mxu0
        %v1604 = vsel %vm1319, %v1549, 0
        %v1607 = vsel %vm1559, %v1553, 0
        %1609 = vmatprep.subr.bf16.mxu0 0
        %1610 = vmatpush1.bf16.msra.mxu0 %v1607
        %1611 = vmatprep.subr.bf16.mxu0 0
        %1612 = vmatpush1.bf16.msra.mxu0 0
        %1613 = vmatprep.subr.bf16.mxu0 0
        %1614 = vmatpush1.bf16.msra.mxu0 0
        %1615 = vmatprep.subr.bf16.mxu0 0
        %1616 = vmatpush1.bf16.msra.mxu0 0
        %1617 = vmatprep.subr.bf16.mxu0 0
        %1618 = vmatpush1.bf16.msra.mxu0 0
        %1619 = vmatprep.subr.bf16.mxu0 0
        %1620 = vmatpush1.bf16.msra.mxu0 0
        %1621 = vmatprep.subr.bf16.mxu0 0
        %1622 = vmatpush1.bf16.msra.mxu0 0
        %1623 = vmatprep.subr.bf16.mxu0 0
        %1624 = vmatpush1.bf16.msra.mxu0 0
        %1625 = vmatprep.subr.bf16.mxu0 0
        %1626 = vmatpush1.bf16.msra.mxu0 0
        %1627 = vmatprep.subr.bf16.mxu0 0
        %1628 = vmatpush1.bf16.msra.mxu0 0
        %1629 = vmatprep.subr.bf16.mxu0 0
        %1630 = vmatpush1.bf16.msra.mxu0 0
        %1631 = vmatprep.subr.bf16.mxu0 0
        %1632 = vmatpush1.bf16.msra.mxu0 0
        %1633 = vmatprep.subr.bf16.mxu0 0
        %1634 = vmatpush1.bf16.msra.mxu0 0
        %1635 = vmatprep.subr.bf16.mxu0 0
        %1636 = vmatpush1.bf16.msra.mxu0 0
        %1637 = vmatprep.subr.bf16.mxu0 0
        %1638 = vmatpush1.bf16.msra.mxu0 0
        %1639 = vmatprep.subr.bf16.mxu0 0
        %1640 = vmatpush1.bf16.msra.mxu0 0
        %1641 = vmatprep.mubr.bf16.mxu0 0
        %1642 = vmatmul.mubr.bf16.gmra.mrb[0].mxu0 %v1604
        %v1643 = vpop.f32.mrb[0].mxu0
        %v1644 = vadd.f32 0.0, %v1643
        %v1645 = vpop.f32.mrb[0].mxu0
        %v1646 = vpop.f32.mrb[0].mxu0
        %v1647 = vpop.f32.mrb[0].mxu0
        %1648 = vdwg.mxu0
        %v1650 = vsel %vm1319, %v1550, 0
        %v1653 = vsel %vm1559, %v1554, 0
        %1655 = vmatprep.subr.bf16.mxu0 0
        %1656 = vmatpush1.bf16.msra.mxu0 %v1653
        %1657 = vmatprep.subr.bf16.mxu0 0
        %1658 = vmatpush1.bf16.msra.mxu0 0
        %1659 = vmatprep.subr.bf16.mxu0 0
        %1660 = vmatpush1.bf16.msra.mxu0 0
        %1661 = vmatprep.subr.bf16.mxu0 0
        %1662 = vmatpush1.bf16.msra.mxu0 0
        %1663 = vmatprep.subr.bf16.mxu0 0
        %1664 = vmatpush1.bf16.msra.mxu0 0
        %1665 = vmatprep.subr.bf16.mxu0 0
        %1666 = vmatpush1.bf16.msra.mxu0 0
        %1667 = vmatprep.subr.bf16.mxu0 0
        %1668 = vmatpush1.bf16.msra.mxu0 0
        %1669 = vmatprep.subr.bf16.mxu0 0
        %1670 = vmatpush1.bf16.msra.mxu0 0
        %1671 = vmatprep.subr.bf16.mxu0 0
        %1672 = vmatpush1.bf16.msra.mxu0 0
        %1673 = vmatprep.subr.bf16.mxu0 0
        %1674 = vmatpush1.bf16.msra.mxu0 0
        %1675 = vmatprep.subr.bf16.mxu0 0
        %1676 = vmatpush1.bf16.msra.mxu0 0
        %1677 = vmatprep.subr.bf16.mxu0 0
        %1678 = vmatpush1.bf16.msra.mxu0 0
        %1679 = vmatprep.subr.bf16.mxu0 0
        %1680 = vmatpush1.bf16.msra.mxu0 0
        %1681 = vmatprep.subr.bf16.mxu0 0
        %1682 = vmatpush1.bf16.msra.mxu0 0
        %1683 = vmatprep.subr.bf16.mxu0 0
        %1684 = vmatpush1.bf16.msra.mxu0 0
        %1685 = vmatprep.subr.bf16.mxu0 0
        %1686 = vmatpush1.bf16.msra.mxu0 0
        %1687 = vmatprep.mubr.bf16.mxu0 0
        %1688 = vmatmul.mubr.bf16.gmra.mrb[0].mxu0 %v1650
        %v1689 = vpop.f32.mrb[0].mxu0
        %v1690 = vadd.f32 0.0, %v1689
        %v1691 = vpop.f32.mrb[0].mxu0
        %v1692 = vpop.f32.mrb[0].mxu0
        %v1693 = vpop.f32.mrb[0].mxu0
        %1694 = vdwg.mxu0
        %v1696 = vsel %vm1319, %v1551, 0
        %v1699 = vsel %vm1559, %v1555, 0
        %1701 = vmatprep.subr.bf16.mxu0 0
        %1702 = vmatpush1.bf16.msra.mxu0 %v1699
        %1703 = vmatprep.subr.bf16.mxu0 0
        %1704 = vmatpush1.bf16.msra.mxu0 0
        %1705 = vmatprep.subr.bf16.mxu0 0
        %1706 = vmatpush1.bf16.msra.mxu0 0
        %1707 = vmatprep.subr.bf16.mxu0 0
        %1708 = vmatpush1.bf16.msra.mxu0 0
        %1709 = vmatprep.subr.bf16.mxu0 0
        %1710 = vmatpush1.bf16.msra.mxu0 0
        %1711 = vmatprep.subr.bf16.mxu0 0
        %1712 = vmatpush1.bf16.msra.mxu0 0
        %1713 = vmatprep.subr.bf16.mxu0 0
        %1714 = vmatpush1.bf16.msra.mxu0 0
        %1715 = vmatprep.subr.bf16.mxu0 0
        %1716 = vmatpush1.bf16.msra.mxu0 0
        %1717 = vmatprep.subr.bf16.mxu0 0
        %1718 = vmatpush1.bf16.msra.mxu0 0
        %1719 = vmatprep.subr.bf16.mxu0 0
        %1720 = vmatpush1.bf16.msra.mxu0 0
        %1721 = vmatprep.subr.bf16.mxu0 0
        %1722 = vmatpush1.bf16.msra.mxu0 0
        %1723 = vmatprep.subr.bf16.mxu0 0
        %1724 = vmatpush1.bf16.msra.mxu0 0
        %1725 = vmatprep.subr.bf16.mxu0 0
        %1726 = vmatpush1.bf16.msra.mxu0 0
        %1727 = vmatprep.subr.bf16.mxu0 0
        %1728 = vmatpush1.bf16.msra.mxu0 0
        %1729 = vmatprep.subr.bf16.mxu0 0
        %1730 = vmatpush1.bf16.msra.mxu0 0
        %1731 = vmatprep.subr.bf16.mxu0 0
        %1732 = vmatpush1.bf16.msra.mxu0 0
        %1733 = vmatprep.mubr.bf16.mxu0 0
        %1734 = vmatmul.mubr.bf16.gmra.mrb[0].mxu0 %v1696
        %v1735 = vpop.f32.mrb[0].mxu0
        %v1736 = vadd.f32 0.0, %v1735
        %v1737 = vpop.f32.mrb[0].mxu0
        %v1738 = vpop.f32.mrb[0].mxu0
        %v1739 = vpop.f32.mrb[0].mxu0
        %1740 = vdwg.mxu0
        %v1741 = vpack.c.bf16 %v1598, %v1598
        %v1742 = vpack.c.bf16 %v1644, %v1644
        %v1743 = vpack.c.bf16 %v1690, %v1690
        %v1744 = vpack.c.bf16 %v1736, %v1736
        %v1745 = vld [vmem:[%s7] sm:$0xf]
        %v1746 = vld [vmem:[%s7 + $0x4] sm:$0xf]
        %v1747 = vld [vmem:[%s7 + $0x8] sm:$0xf]
        %v1748 = vld [vmem:[%s7 + $0xc] sm:$0xf]
        %v1750 = vsel %vm1319, %v1741, 0
        %v1753 = vsel %vm1559, %v1745, 0
        %1755 = vmatprep.subr.bf16.mxu0 0
        %1756 = vmatpush1.bf16.msra.mxu0 %v1753
        %1757 = vmatprep.subr.bf16.mxu0 0
        %1758 = vmatpush1.bf16.msra.mxu0 0
        %1759 = vmatprep.subr.bf16.mxu0 0
        %1760 = vmatpush1.bf16.msra.mxu0 0
        %1761 = vmatprep.subr.bf16.mxu0 0
        %1762 = vmatpush1.bf16.msra.mxu0 0
        %1763 = vmatprep.subr.bf16.mxu0 0
        %1764 = vmatpush1.bf16.msra.mxu0 0
        %1765 = vmatprep.subr.bf16.mxu0 0
        %1766 = vmatpush1.bf16.msra.mxu0 0
        %1767 = vmatprep.subr.bf16.mxu0 0
        %1768 = vmatpush1.bf16.msra.mxu0 0
        %1769 = vmatprep.subr.bf16.mxu0 0
        %1770 = vmatpush1.bf16.msra.mxu0 0
        %1771 = vmatprep.subr.bf16.mxu0 0
        %1772 = vmatpush1.bf16.msra.mxu0 0
        %1773 = vmatprep.subr.bf16.mxu0 0
        %1774 = vmatpush1.bf16.msra.mxu0 0
        %1775 = vmatprep.subr.bf16.mxu0 0
        %1776 = vmatpush1.bf16.msra.mxu0 0
        %1777 = vmatprep.subr.bf16.mxu0 0
        %1778 = vmatpush1.bf16.msra.mxu0 0
        %1779 = vmatprep.subr.bf16.mxu0 0
        %1780 = vmatpush1.bf16.msra.mxu0 0
        %1781 = vmatprep.subr.bf16.mxu0 0
        %1782 = vmatpush1.bf16.msra.mxu0 0
        %1783 = vmatprep.subr.bf16.mxu0 0
        %1784 = vmatpush1.bf16.msra.mxu0 0
        %1785 = vmatprep.subr.bf16.mxu0 0
        %1786 = vmatpush1.bf16.msra.mxu0 0
        %1787 = vmatprep.mubr.bf16.mxu0 0
        %1788 = vmatmul.mubr.bf16.gmra.mrb[0].mxu0 %v1750
        %v1789 = vpop.f32.mrb[0].mxu0
        %v1790 = vadd.f32 0.0, %v1789
        %v1791 = vpop.f32.mrb[0].mxu0
        %v1792 = vpop.f32.mrb[0].mxu0
        %v1793 = vpop.f32.mrb[0].mxu0
        %1794 = vdwg.mxu0
        %v1796 = vsel %vm1319, %v1742, 0
        %v1799 = vsel %vm1559, %v1746, 0
        %1801 = vmatprep.subr.bf16.mxu0 0
        %1802 = vmatpush1.bf16.msra.mxu0 %v1799
        %1803 = vmatprep.subr.bf16.mxu0 0
        %1804 = vmatpush1.bf16.msra.mxu0 0
        %1805 = vmatprep.subr.bf16.mxu0 0
        %1806 = vmatpush1.bf16.msra.mxu0 0
        %1807 = vmatprep.subr.bf16.mxu0 0
        %1808 = vmatpush1.bf16.msra.mxu0 0
        %1809 = vmatprep.subr.bf16.mxu0 0
        %1810 = vmatpush1.bf16.msra.mxu0 0
        %1811 = vmatprep.subr.bf16.mxu0 0
        %1812 = vmatpush1.bf16.msra.mxu0 0
        %1813 = vmatprep.subr.bf16.mxu0 0
        %1814 = vmatpush1.bf16.msra.mxu0 0
        %1815 = vmatprep.subr.bf16.mxu0 0
        %1816 = vmatpush1.bf16.msra.mxu0 0
        %1817 = vmatprep.subr.bf16.mxu0 0
        %1818 = vmatpush1.bf16.msra.mxu0 0
        %1819 = vmatprep.subr.bf16.mxu0 0
        %1820 = vmatpush1.bf16.msra.mxu0 0
        %1821 = vmatprep.subr.bf16.mxu0 0
        %1822 = vmatpush1.bf16.msra.mxu0 0
        %1823 = vmatprep.subr.bf16.mxu0 0
        %1824 = vmatpush1.bf16.msra.mxu0 0
        %1825 = vmatprep.subr.bf16.mxu0 0
        %1826 = vmatpush1.bf16.msra.mxu0 0
        %1827 = vmatprep.subr.bf16.mxu0 0
        %1828 = vmatpush1.bf16.msra.mxu0 0
        %1829 = vmatprep.subr.bf16.mxu0 0
        %1830 = vmatpush1.bf16.msra.mxu0 0
        %1831 = vmatprep.subr.bf16.mxu0 0
        %1832 = vmatpush1.bf16.msra.mxu0 0
        %1833 = vmatprep.mubr.bf16.mxu0 0
        %1834 = vmatmul.mubr.bf16.gmra.mrb[0].mxu0 %v1796
        %v1835 = vpop.f32.mrb[0].mxu0
        %v1836 = vadd.f32 0.0, %v1835
        %v1837 = vpop.f32.mrb[0].mxu0
        %v1838 = vpop.f32.mrb[0].mxu0
        %v1839 = vpop.f32.mrb[0].mxu0
        %1840 = vdwg.mxu0
        %v1842 = vsel %vm1319, %v1743, 0
        %v1845 = vsel %vm1559, %v1747, 0
        %1847 = vmatprep.subr.bf16.mxu0 0
        %1848 = vmatpush1.bf16.msra.mxu0 %v1845
        %1849 = vmatprep.subr.bf16.mxu0 0
        %1850 = vmatpush1.bf16.msra.mxu0 0
        %1851 = vmatprep.subr.bf16.mxu0 0
        %1852 = vmatpush1.bf16.msra.mxu0 0
        %1853 = vmatprep.subr.bf16.mxu0 0
        %1854 = vmatpush1.bf16.msra.mxu0 0
        %1855 = vmatprep.subr.bf16.mxu0 0
        %1856 = vmatpush1.bf16.msra.mxu0 0
        %1857 = vmatprep.subr.bf16.mxu0 0
        %1858 = vmatpush1.bf16.msra.mxu0 0
        %1859 = vmatprep.subr.bf16.mxu0 0
        %1860 = vmatpush1.bf16.msra.mxu0 0
        %1861 = vmatprep.subr.bf16.mxu0 0
        %1862 = vmatpush1.bf16.msra.mxu0 0
        %1863 = vmatprep.subr.bf16.mxu0 0
        %1864 = vmatpush1.bf16.msra.mxu0 0
        %1865 = vmatprep.subr.bf16.mxu0 0
        %1866 = vmatpush1.bf16.msra.mxu0 0
        %1867 = vmatprep.subr.bf16.mxu0 0
        %1868 = vmatpush1.bf16.msra.mxu0 0
        %1869 = vmatprep.subr.bf16.mxu0 0
        %1870 = vmatpush1.bf16.msra.mxu0 0
        %1871 = vmatprep.subr.bf16.mxu0 0
        %1872 = vmatpush1.bf16.msra.mxu0 0
        %1873 = vmatprep.subr.bf16.mxu0 0
        %1874 = vmatpush1.bf16.msra.mxu0 0
        %1875 = vmatprep.subr.bf16.mxu0 0
        %1876 = vmatpush1.bf16.msra.mxu0 0
        %1877 = vmatprep.subr.bf16.mxu0 0
        %1878 = vmatpush1.bf16.msra.mxu0 0
        %1879 = vmatprep.mubr.bf16.mxu0 0
        %1880 = vmatmul.mubr.bf16.gmra.mrb[0].mxu0 %v1842
        %v1881 = vpop.f32.mrb[0].mxu0
        %v1882 = vadd.f32 0.0, %v1881
        %v1883 = vpop.f32.mrb[0].mxu0
        %v1884 = vpop.f32.mrb[0].mxu0
        %v1885 = vpop.f32.mrb[0].mxu0
        %1886 = vdwg.mxu0
        %v1888 = vsel %vm1319, %v1744, 0
        %v1891 = vsel %vm1559, %v1748, 0
        %1893 = vmatprep.subr.bf16.mxu0 0
        %1894 = vmatpush1.bf16.msra.mxu0 %v1891
        %1895 = vmatprep.subr.bf16.mxu0 0
        %1896 = vmatpush1.bf16.msra.mxu0 0
        %1897 = vmatprep.subr.bf16.mxu0 0
        %1898 = vmatpush1.bf16.msra.mxu0 0
        %1899 = vmatprep.subr.bf16.mxu0 0
        %1900 = vmatpush1.bf16.msra.mxu0 0
        %1901 = vmatprep.subr.bf16.mxu0 0
        %1902 = vmatpush1.bf16.msra.mxu0 0
        %1903 = vmatprep.subr.bf16.mxu0 0
        %1904 = vmatpush1.bf16.msra.mxu0 0
        %1905 = vmatprep.subr.bf16.mxu0 0
        %1906 = vmatpush1.bf16.msra.mxu0 0
        %1907 = vmatprep.subr.bf16.mxu0 0
        %1908 = vmatpush1.bf16.msra.mxu0 0
        %1909 = vmatprep.subr.bf16.mxu0 0
        %1910 = vmatpush1.bf16.msra.mxu0 0
        %1911 = vmatprep.subr.bf16.mxu0 0
        %1912 = vmatpush1.bf16.msra.mxu0 0
        %1913 = vmatprep.subr.bf16.mxu0 0
        %1914 = vmatpush1.bf16.msra.mxu0 0
        %1915 = vmatprep.subr.bf16.mxu0 0
        %1916 = vmatpush1.bf16.msra.mxu0 0
        %1917 = vmatprep.subr.bf16.mxu0 0
        %1918 = vmatpush1.bf16.msra.mxu0 0
        %1919 = vmatprep.subr.bf16.mxu0 0
        %1920 = vmatpush1.bf16.msra.mxu0 0
        %1921 = vmatprep.subr.bf16.mxu0 0
        %1922 = vmatpush1.bf16.msra.mxu0 0
        %1923 = vmatprep.subr.bf16.mxu0 0
        %1924 = vmatpush1.bf16.msra.mxu0 0
        %1925 = vmatprep.mubr.bf16.mxu0 0
        %1926 = vmatmul.mubr.bf16.gmra.mrb[0].mxu0 %v1888
        %v1927 = vpop.f32.mrb[0].mxu0
        %v1928 = vadd.f32 0.0, %v1927
        %v1929 = vpop.f32.mrb[0].mxu0
        %v1930 = vpop.f32.mrb[0].mxu0
        %v1931 = vpop.f32.mrb[0].mxu0
        %1932 = vdwg.mxu0
        %v1933 = vsel %vm603, %v1790, 0.0
        %v1934 = vsel %vm603, %v1836, 0.0
        %v1935 = vadd.f32 %v1933, %v1934
        %v1936 = vsel %vm603, %v1882, 0.0
        %v1937 = vadd.f32 %v1935, %v1936
        %v1938 = vsel %vm603, %v1928, 0.0
        %v1939 = vadd.f32 %v1937, %v1938
        %v1940 = vld [vmem:[%s8] sm:$0x1]
        %v1942 = vlaneseq
        %v1943 = vshrl.u32 %v1942, 7
        %v1944 = vsub.s32 0, %v1943
        %v1945 = vrot.slane %v1940, %v1944
        %v1947 = vadd.f32 %v1939, %v1945
        %v1948 = vadd.f32 %v545, %v1947
        %v1949 = vld [vmem:[%s9] sm:$0x1]
        %v1950 = vld [vmem:[%s10] sm:$0x1]
        %v1951 = vsel %vm603, %v1948, 0.0
        %1952 = vadd.xlane.f32.xlu0 %v1951
        %v1953 = vpop.xlane.xlu0 %1952
        %v1954 = vrcp.pop 32.0
        %v1955 = vmul.f32 %v1953, %v1954
        %v1956 = vsub.f32 %v1948, %v1955
        %v1957 = vmul.f32 %v1956, %v1956
        %v1958 = vsel %vm603, %v1957, 0.0
        %1959 = vadd.xlane.f32.xlu0 %v1958
        %v1960 = vpop.xlane.xlu0 %1959
        %v1961 = vmul.f32 %v1960, %v1954
        %v1962 = vadd.f32 %v1961, 1e-05
        %v1963 = vrsqrt.pop %v1962
        %v1964 = vmul.f32 %v1956, %v1963
        %v1966 = vlaneseq
        %v1967 = vshrl.u32 %v1966, 7
        %v1968 = vsub.s32 0, %v1967
        %v1969 = vrot.slane %v1949, %v1968
        %v1971 = vmul.f32 %v1964, %v1969
        %v1973 = vlaneseq
        %v1974 = vshrl.u32 %v1973, 7
        %v1975 = vsub.s32 0, %v1974
        %v1976 = vrot.slane %v1950, %v1975
        %v1978 = vadd.f32 %v1971, %v1976
        %v1979 = vpack.c.bf16 %v1978, %v1978
        %v1980 = vld [vmem:[%s11] sm:$0xf]
        %v1981 = vld [vmem:[%s11 + $0x4] sm:$0xf]
        %v1982 = vld [vmem:[%s11 + $0x8] sm:$0xf]
        %v1983 = vld [vmem:[%s11 + $0xc] sm:$0xf]
        %v1984 = vld [vmem:[%s12] sm:$0x1]
        %v1986 = vlaneseq
        %v1987 = vshrl.u32 %v1986, 7
        %v1988 = vsub.s32 0, %v1987
        %v1989 = vrot.slane %v1984, %v1988
        %v1995 = vunpack.c.l.b16 %v1980
        %v1996 = vunpack.c.l.b16 %v1981
        %v1997 = vunpack.c.l.b16 %v1982
        %v1998 = vunpack.c.l.b16 %v1983
        %v1999 = vpack.c.b16 %v1996, %v1995
        %v2000 = vpack.c.b16 %v1998, %v1997
        %v2004 = vsel %vm603, %v1979, 0
        %2006 = vmatprep.subr.bf16.mxu0 0
        %2007 = vmatpush1.bf16.msra.mxu0 %v1999
        %2008 = vmatprep.subr.bf16.mxu0 0
        %2009 = vmatpush1.bf16.msra.mxu0 %v2000
        %2010 = vmatprep.subr.bf16.mxu0 0
        %2011 = vmatpush1.bf16.msra.mxu0 0
        %2012 = vmatprep.subr.bf16.mxu0 0
        %2013 = vmatpush1.bf16.msra.mxu0 0
        %2014 = vmatprep.subr.bf16.mxu0 0
        %2015 = vmatpush1.bf16.msra.mxu0 0
        %2016 = vmatprep.subr.bf16.mxu0 0
        %2017 = vmatpush1.bf16.msra.mxu0 0
        %2018 = vmatprep.subr.bf16.mxu0 0
        %2019 = vmatpush1.bf16.msra.mxu0 0
        %2020 = vmatprep.subr.bf16.mxu0 0
        %2021 = vmatpush1.bf16.msra.mxu0 0
        %2022 = vmatprep.subr.bf16.mxu0 0
        %2023 = vmatpush1.bf16.msra.mxu0 0
        %2024 = vmatprep.subr.bf16.mxu0 0
        %2025 = vmatpush1.bf16.msra.mxu0 0
        %2026 = vmatprep.subr.bf16.mxu0 0
        %2027 = vmatpush1.bf16.msra.mxu0 0
        %2028 = vmatprep.subr.bf16.mxu0 0
        %2029 = vmatpush1.bf16.msra.mxu0 0
        %2030 = vmatprep.subr.bf16.mxu0 0
        %2031 = vmatpush1.bf16.msra.mxu0 0
        %2032 = vmatprep.subr.bf16.mxu0 0
        %2033 = vmatpush1.bf16.msra.mxu0 0
        %2034 = vmatprep.subr.bf16.mxu0 0
        %2035 = vmatpush1.bf16.msra.mxu0 0
        %2036 = vmatprep.subr.bf16.mxu0 0
        %2037 = vmatpush1.bf16.msra.mxu0 0
        %2038 = vmatprep.mubr.bf16.mxu0 0
        %2039 = vmatmul.mubr.bf16.gmra.mrb[0].mxu0 %v2004
        %v2040 = vpop.f32.mrb[0].mxu0
        %v2041 = vadd.f32 %v1989, %v2040
        %v2042 = vpop.f32.mrb[0].mxu0
        %v2043 = vpop.f32.mrb[0].mxu0
        %v2044 = vpop.f32.mrb[0].mxu0
        %2045 = vdwg.mxu0
        %v2046 = vmax.f32 %v2041, 0.0
        %v2047 = vpack.c.bf16 %v2046, %v2046
        %v2048 = vld [vmem:[%s13] sm:$0xf]
        %v2049 = vld [vmem:[%s13 + $0x4] sm:$0xf]
        %v2050 = vld [vmem:[%s13 + $0x8] sm:$0xf]
        %v2051 = vld [vmem:[%s13 + $0xc] sm:$0xf]
        %v2052 = vld [vmem:[%s13 + $0x10] sm:$0xf]
        %v2053 = vld [vmem:[%s13 + $0x14] sm:$0xf]
        %v2054 = vld [vmem:[%s13 + $0x18] sm:$0xf]
        %v2055 = vld [vmem:[%s13 + $0x1c] sm:$0xf]
        %v2056 = vld [vmem:[%s14] sm:$0x1]
        %v2058 = vlaneseq
        %v2059 = vshrl.u32 %v2058, 7
        %v2060 = vsub.s32 0, %v2059
        %v2061 = vrot.slane %v2056, %v2060
        %v2071 = vunpack.c.l.b16 %v2048
        %v2072 = vunpack.c.l.b16 %v2049
        %v2073 = vunpack.c.l.b16 %v2050
        %v2074 = vunpack.c.l.b16 %v2051
        %v2075 = vunpack.c.l.b16 %v2052
        %v2076 = vunpack.c.l.b16 %v2053
        %v2077 = vunpack.c.l.b16 %v2054
        %v2078 = vunpack.c.l.b16 %v2055
        %v2079 = vpack.c.b16 %v2072, %v2071
        %v2080 = vpack.c.b16 %v2074, %v2073
        %v2081 = vpack.c.b16 %v2076, %v2075
        %v2082 = vpack.c.b16 %v2078, %v2077
        %vm2087 = vcmask 523264
        %v2089 = vsel %vm2087, %v2047, 0
        %2091 = vmatprep.subr.bf16.mxu0 0
        %2092 = vmatpush1.bf16.msra.mxu0 %v2079
        %2093 = vmatprep.subr.bf16.mxu0 0
        %2094 = vmatpush1.bf16.msra.mxu0 %v2080
        %2095 = vmatprep.subr.bf16.mxu0 0
        %2096 = vmatpush1.bf16.msra.mxu0 %v2081
        %2097 = vmatprep.subr.bf16.mxu0 0
        %2098 = vmatpush1.bf16.msra.mxu0 %v2082
        %2099 = vmatprep.subr.bf16.mxu0 0
        %2100 = vmatpush1.bf16.msra.mxu0 0
        %2101 = vmatprep.subr.bf16.mxu0 0
        %2102 = vmatpush1.bf16.msra.mxu0 0
        %2103 = vmatprep.subr.bf16.mxu0 0
        %2104 = vmatpush1.bf16.msra.mxu0 0
        %2105 = vmatprep.subr.bf16.mxu0 0
        %2106 = vmatpush1.bf16.msra.mxu0 0
        %2107 = vmatprep.subr.bf16.mxu0 0
        %2108 = vmatpush1.bf16.msra.mxu0 0
        %2109 = vmatprep.subr.bf16.mxu0 0
        %2110 = vmatpush1.bf16.msra.mxu0 0
        %2111 = vmatprep.subr.bf16.mxu0 0
        %2112 = vmatpush1.bf16.msra.mxu0 0
        %2113 = vmatprep.subr.bf16.mxu0 0
        %2114 = vmatpush1.bf16.msra.mxu0 0
        %2115 = vmatprep.subr.bf16.mxu0 0
        %2116 = vmatpush1.bf16.msra.mxu0 0
        %2117 = vmatprep.subr.bf16.mxu0 0
        %2118 = vmatpush1.bf16.msra.mxu0 0
        %2119 = vmatprep.subr.bf16.mxu0 0
        %2120 = vmatpush1.bf16.msra.mxu0 0
        %2121 = vmatprep.subr.bf16.mxu0 0
        %2122 = vmatpush1.bf16.msra.mxu0 0
        %2123 = vmatprep.mubr.bf16.mxu0 0
        %2124 = vmatmul.mubr.bf16.gmra.mrb[0].mxu0 %v2089
        %v2125 = vpop.f32.mrb[0].mxu0
        %v2126 = vadd.f32 %v2061, %v2125
        %v2127 = vpop.f32.mrb[0].mxu0
        %v2128 = vpop.f32.mrb[0].mxu0
        %v2129 = vpop.f32.mrb[0].mxu0
        %2130 = vdwg.mxu0
        %v2131 = vadd.f32 %v1978, %v2126
        %v2132 = vld [vmem:[%s15] sm:$0x1]
        %v2133 = vld [vmem:[%s16] sm:$0x1]
        %v2134 = vsel %vm603, %v2131, 0.0
        %2135 = vadd.xlane.f32.xlu0 %v2134
        %v2136 = vpop.xlane.xlu0 %2135
        %v2137 = vmul.f32 %v2136, %v1954
        %v2138 = vsub.f32 %v2131, %v2137
        %v2139 = vmul.f32 %v2138, %v2138
        %v2140 = vsel %vm603, %v2139, 0.0
        %2141 = vadd.xlane.f32.xlu0 %v2140
        %v2142 = vpop.xlane.xlu0 %2141
        %v2143 = vmul.f32 %v2142, %v1954
        %v2144 = vadd.f32 %v2143, 1e-05
        %v2145 = vrsqrt.pop %v2144
        %v2146 = vmul.f32 %v2138, %v2145
        %v2148 = vlaneseq
        %v2149 = vshrl.u32 %v2148, 7
        %v2150 = vsub.s32 0, %v2149
        %v2151 = vrot.slane %v2132, %v2150
        %v2153 = vmul.f32 %v2146, %v2151
        %v2155 = vlaneseq
        %v2156 = vshrl.u32 %v2155, 7
        %v2157 = vsub.s32 0, %v2156
        %v2158 = vrot.slane %v2133, %v2157
        %v2160 = vadd.f32 %v2153, %v2158
        %2161 = vst.msk [vmem:[%s539] sm:$0xff] %vm603, %v2160
        %s2162 = sand.u32 %s401, 1
        %s2163 = scalar_lea.sflag [#allocation3], %s2162
        %s2164 = sand.u32 %s401, 1
        %s2165 = smul.addr %s2164, 8
        %s2166 = scalar_lea.vmem [#allocation2], %s2165
        // Predicated region
        $region89: #{tpu_custom_call.1} parent=87 // pred_check
          %p2167 = pneg %p411
        $region90: #{tpu_custom_call.1} parent=87 // pred_check_branch
          %2169 = sbr.rel (%p2167) target = $region92
        $region91: #{tpu_custom_call.1} parent=87 // pred_region
          %s2171 = ssub.s32 128, 128
          %2172 = vsyncadd %s2163, %s2171
          %s2173 = smul.addr %s31, 128
          %s2174 = scalar_lea.hbm %s17, %s2173
          %s2176 = sshll.u32 %s2166, 4
          %s2177 = int_to_ptr.vmem [resolvable:$true] %s2176
          %2179 = dma.vmem_to_hbm [thread:$0]  %s2177, 128, %s2174, %s2163
        $region92: #{tpu_custom_call.1} parent=87 // pred_fallthru
          _
      $region88: #{tpu_custom_call.1} parent=5 // pred_fallthru
        _
      %p2180 = scmp.le.s32.totalorder 2, %s26
      // Predicated region
      $region93: #{tpu_custom_call.1} parent=5 // pred_check
        %p2181 = pneg %p2180
      $region94: #{tpu_custom_call.1} parent=5 // pred_check_branch
        %2183 = sbr.rel (%p2181) target = $region96
      $region95: #{tpu_custom_call.1} parent=5 // pred_region
        %s2184 = ssub.s32 %s26, 2
        // Predicated region
        $region97: #{tpu_custom_call.1} parent=95 // pred_check
          %p2185 = pneg %p417
        $region98: #{tpu_custom_call.1} parent=95 // pred_check_branch
          %2187 = sbr.rel (%p2185) target = $region100
        $region99: #{tpu_custom_call.1} parent=95 // pred_region
          %s2188 = sand.u32 %s402, 1
          %s2189 = scalar_lea.sflag [#allocation3], %s2188
          %s2190 = sand.u32 %s402, 1
          %s2191 = smul.addr %s2190, 8
          %s2192 = scalar_lea.vmem [#allocation2], %s2191
          %2193 = dma.done %s2189, 128
        $region100: #{tpu_custom_call.1} parent=95 // pred_fallthru
          _
      $region96: #{tpu_custom_call.1} parent=5 // pred_fallthru
        _
    $region6: #{tpu_custom_call.1} parent=1 // loop_footer
      %s30 = sadd.s32 1, %s26
    $region7: #{tpu_custom_call.1} parent=1 // loop_footer_branch
      %25 = sbr.rel target = $region3
    $region8: #{tpu_custom_call.1} parent=1 // loop_exit
      _
    %2194 = vsyncpa [#allocation3], 1
    %s2195 = scalar_lea.sflag [#allocation3], 1
    %2196 = vsyncpa %s2195, 1

</llo_original>
